<compile_context>
chip_gen: v7x
topology: tpu7x:2x2x1
jax: 0.10.0
libtpu: 0.0.40
codegen_flags: <defaults>
</compile_context>

<pallas_src>
import numpy as np
import jax
import jax.numpy as jnp
from jax.experimental import pallas as pl
from jax.experimental.pallas import tpu as pltpu


# Peak live f32 (tb, tn, P) / (tb, D) temporaries assumed by the working-set model.
_F32_PATCH_TEMPS = 6
_F32_CLS_TEMPS = 6
_BUDGETS = None   # (vmem_limit_bytes, tile_budget_bytes), filled lazily


def _vmem_budgets():
    """Per-generation VMEM scoped limit and per-step working-set budget."""
    global _BUDGETS
    if _BUDGETS is None:
        try:
            cap = int(pltpu.get_tpu_info().vmem_capacity_bytes)
        except Exception:
            cap = 0
        if cap <= 0:
            cap = 64 * 1024 * 1024                     # conservative (v7x-sized) fallback
        if cap >= 100 * 1024 * 1024:                   # v5e / v6e: 128 MiB physical VMEM
            limit, budget = 96 * 1024 * 1024, 48 * 1024 * 1024
        else:                                          # v7x: 64 MiB physical VMEM
            limit, budget = 44 * 1024 * 1024, 18 * 1024 * 1024
        limit = min(limit, int(cap * 0.75))
        _BUDGETS = (limit, budget)
    return _BUDGETS


def _sublane_multiple(dtype):
    """Required sublane multiple for a block dim of this dtype (f32->8, bf16->16, i8->32)."""
    return max(8, 32 // max(1, jnp.dtype(dtype).itemsize))


def _tile_candidates(full, multiple):
    """Divisors of `full` that are multiples of `multiple`, plus `full` itself."""
    cands = {full}
    for t in range(multiple, full, multiple):
        if full % t == 0:
            cands.add(t)
    return sorted(cands)


def _working_set_bytes(tb, tn, D, P, cls_in_itemsize, pat_in_itemsize):
    """Modeled per-step VMEM footprint (double-buffered inputs + f32 temporaries + scratch)."""
    pat_inputs = 2 * tb * tn * P * pat_in_itemsize          # t_pat + s_pat blocks, x2 buffers
    mask_inputs = 2 * tb * tn * 4                           # f32 mask block, x2 buffers
    cls_inputs = 2 * tb * D * cls_in_itemsize               # t_cls + s_cls blocks, x2 buffers
    pat_temps = _F32_PATCH_TEMPS * tb * tn * P * 4
    cls_temps = _F32_CLS_TEMPS * tb * D * 4
    scratch = 2 * tb * D * 4 + 2 * max(tb, 8) * 128 * 4     # tsum/ssum + padded (tb,1) accums
    misc = 4 * (D + P) * 4 + (1 << 15)                      # centers, partial outputs, slack
    return pat_inputs + mask_inputs + cls_inputs + pat_temps + cls_temps + scratch + misc


def _fast_recip(x):
    """EUP approximate reciprocal + one Newton-Raphson step (~f32 accurate)."""
    r = pl.reciprocal(x, approx=True)
    return r * (2.0 - x * r)


def _softmax_last(x):
    m = jnp.max(x, axis=-1, keepdims=True)
    e = jnp.exp(x - m)
    return e * _fast_recip(jnp.sum(e, axis=-1, keepdims=True))


def _log_softmax_last(x):
    s = x - jnp.max(x, axis=-1, keepdims=True)
    return s - jnp.log(jnp.sum(jnp.exp(s), axis=-1, keepdims=True))


def _make_kernel(inv_temp, inv_temp2, inv_stemp):
    """Kernel body.  Grid = (batch_tile i, crop g, token_tile t); i is the parallel axis."""

    def kernel(t_cls_ref,        # (1, tb, D)      teacher cls block (native dtype)
               s_cls_ref,        # (1, tb, D)      student cls block
               center_ref,       # (1, D)          f32
               t_pat_ref,        # (1, tb, tn, P)  teacher patch block
               s_pat_ref,        # (1, tb, tn, P)  student patch block
               center2_ref,      # (1, P)          f32
               mask_ref,         # (1, tb, tn, 1)  f32, 1.0 == masked
               loss1_ref,        # out (1, 1, 1)   per-batch-tile cls-loss partial
               loss2_ref,        # out (1, 1, 1)   per-batch-tile patch-loss partial
               csum_ref,         # out (1, 1, D)   per-batch-tile teacher cls raw sum
               c2sum_ref,        # out (1, 1, P)   per-batch-tile teacher patch raw sum
               tsum, ssum,       # scratch (tb, D) f32: sums over crops for the cross term
               num_acc, den_acc  # scratch (tb, 1) f32: masked-CE numerator / keep count
               ):
        g = pl.program_id(1)
        t = pl.program_id(2)
        ng = pl.num_programs(1)
        nt = pl.num_programs(2)

        # ---- per-batch-tile init (first step of this tile's (crop, token) loop) ----
        @pl.when((g == 0) & (t == 0))
        def _init():
            loss1_ref[...] = jnp.zeros_like(loss1_ref)
            loss2_ref[...] = jnp.zeros_like(loss2_ref)
            csum_ref[...] = jnp.zeros_like(csum_ref)
            c2sum_ref[...] = jnp.zeros_like(c2sum_ref)
            tsum[...] = jnp.zeros_like(tsum)
            ssum[...] = jnp.zeros_like(ssum)

        # ---------------- [CLS] branch: once per (batch tile, crop) ----------------
        @pl.when(t == 0)
        def _cls_branch():
            # reset per-(batch tile, crop) masked-CE accumulators
            num_acc[...] = jnp.zeros_like(num_acc)
            den_acc[...] = jnp.zeros_like(den_acc)

            t_cls = t_cls_ref[0].astype(jnp.float32)           # (tb, D)
            s_cls = s_cls_ref[0].astype(jnp.float32)
            center = center_ref[...]                           # (1, D) f32

            t_sm = _softmax_last((t_cls - center) * inv_temp)
            s_lsm = _log_softmax_last(s_cls * inv_stemp)

            # Factored pairwise CE over crops:
            #   sum_{q != v} -<t_q, s_v> = sum_q <t_q, s_q> - <sum_q t_q, sum_v s_v>
            loss1_ref[...] = loss1_ref[...] + jnp.sum(t_sm * s_lsm)        # diagonal part
            tsum[...] = tsum[...] + t_sm
            ssum[...] = ssum[...] + s_lsm
            csum_ref[...] = csum_ref[...] + jnp.sum(t_cls, axis=0, keepdims=True)[None]

        @pl.when((t == 0) & (g == ng - 1))
        def _cls_cross_term():
            loss1_ref[...] = loss1_ref[...] - jnp.sum(tsum[...] * ssum[...])

        # ------- patch (MIM) branch: every (batch tile, crop, token tile) step -------
        # Folded cross-entropy (softmax/log-softmax never materialized over the slab):
        #   sum_p -softmax(t)_p * log_softmax(s)_p = lse_s - (1/Z_t) * sum_p e_t_p * s_shift_p
        t_pat = t_pat_ref[0].astype(jnp.float32)               # (tb, tn, P)
        s_pat = s_pat_ref[0].astype(jnp.float32)
        center2 = center2_ref[...]                             # (1, P) f32
        keep = 1.0 - mask_ref[0]                               # (tb, tn, 1), 1 == un-masked

        t_shift = (t_pat - center2[None]) * inv_temp2
        t_shift = t_shift - jnp.max(t_shift, axis=-1, keepdims=True)
        e_t = jnp.exp(t_shift)
        z_t = jnp.sum(e_t, axis=-1, keepdims=True)             # (tb, tn, 1)

        s_shift = s_pat * inv_stemp
        s_shift = s_shift - jnp.max(s_shift, axis=-1, keepdims=True)
        lse_s = jnp.log(jnp.sum(jnp.exp(s_shift), axis=-1, keepdims=True))

        dot_ts = jnp.sum(e_t * s_shift, axis=-1, keepdims=True)
        tok_ce = lse_s - dot_ts * _fast_recip(z_t)             # (tb, tn, 1)

        num_acc[...] = num_acc[...] + jnp.sum(tok_ce * keep, axis=1)   # (tb, 1)
        den_acc[...] = den_acc[...] + jnp.sum(keep, axis=1)            # (tb, 1)
        c2sum_ref[...] = c2sum_ref[...] + jnp.sum(t_pat, axis=(0, 1), keepdims=True)

        @pl.when(t == nt - 1)
        def _patch_finalize():
            per_sample = num_acc[...] * _fast_recip(jnp.maximum(den_acc[...], 1.0))
            loss2_ref[...] = loss2_ref[...] + jnp.sum(per_sample)

    return kernel


class VehicleMAELoss:
    """JAX/Pallas port of the PyTorch VehicleMAELoss module (forward + center EMA)."""

    def __init__(self, out_dim, patch_out_dim, ngcrops, nlcrops,
                 warmup_teacher_temp, teacher_temp,
                 warmup_teacher_temp2, teacher_temp2,
                 warmup_teacher_temp_epochs, nepochs,
                 student_temp=0.1, center_momentum=0.9, center_momentum2=0.9,
                 lambda1=1.0, lambda2=1.0, mim_start_epoch=0,
                 batch_tile=None, token_tile=None):
        self.student_temp = student_temp
        self.center_momentum = center_momentum
        self.center_momentum2 = center_momentum2
        self.ngcrops = ngcrops
        self.nlcrops = nlcrops
        self.ncrops = ngcrops + nlcrops
        self.lambda1 = lambda1
        self.lambda2 = lambda2
        self.batch_tile = batch_tile
        self.token_tile = token_tile
        # buffers (deterministic init: zeros, same as register_buffer)
        self.center = jnp.zeros((1, out_dim), jnp.float32)
        self.center2 = jnp.zeros((1, 1, patch_out_dim), jnp.float32)
        self.teacher_temp_schedule = np.concatenate((
            np.linspace(warmup_teacher_temp, teacher_temp, warmup_teacher_temp_epochs),
            np.ones(nepochs - warmup_teacher_temp_epochs) * teacher_temp))
        if mim_start_epoch == 0:
            self.teacher_temp2_schedule = np.concatenate((
                np.linspace(warmup_teacher_temp2, teacher_temp2, warmup_teacher_temp_epochs),
                np.ones(nepochs - warmup_teacher_temp_epochs) * teacher_temp2))
        else:
            self.teacher_temp2_schedule = np.concatenate((
                np.ones(mim_start_epoch) * warmup_teacher_temp2,
                np.linspace(warmup_teacher_temp2, teacher_temp2, warmup_teacher_temp_epochs),
                np.ones(nepochs - warmup_teacher_temp_epochs - mim_start_epoch) * teacher_temp2))
        self._cache = {}   # (shape/dtype/temperature/tile) -> compiled pallas_call

    # ------------------------------------------------------------------ #
    def _select_tiles(self, B, N, D, P, cls_in_itemsize, pat_in_itemsize, tb_mult, tn_mult):
        vmem_limit, budget = _vmem_budgets()
        tbs = _tile_candidates(B, tb_mult)
        tns = _tile_candidates(N, tn_mult)
        if self.batch_tile is not None and self.batch_tile in tbs:
            tbs = [self.batch_tile]
        if self.token_tile is not None and self.token_tile in tns:
            tns = [self.token_tile]

        best, best_key = None, None
        for tb in tbs:
            for tn in tns:
                ws = _working_set_bytes(tb, tn, D, P, cls_in_itemsize, pat_in_itemsize)
                if ws <= budget:
                    key = (tb * tn, tb)           # biggest tile that fits; prefer larger tb
                    if best_key is None or key > best_key:
                        best, best_key = (tb, tn), key
        if best is None:
            # Nothing fits the soft budget: take the smallest layout-legal tiles, but
            # never silently exceed the hard VMEM limit.
            tb, tn = tbs[0], tns[0]
            ws = _working_set_bytes(tb, tn, D, P, cls_in_itemsize, pat_in_itemsize)
            if ws > vmem_limit:
                raise ValueError(
                    "VehicleMAELoss: no (batch_tile, token_tile) fits in VMEM: minimal "
                    f"working set {ws / 2**20:.1f} MiB > limit {vmem_limit / 2**20:.1f} MiB "
                    f"(B={B}, N={N}, P={P}, D={D}).")
            best = (tb, tn)
        return best

    # ------------------------------------------------------------------ #
    def _build(self, G, B, N, P, D, tb, tn, temp, temp2, vmem_limit):
        # Temperatures are baked host-side as inverse-temperature constants
        # (at most warmup_epochs+1 distinct values -> bounded recompiles).
        kernel = _make_kernel(1.0 / temp, 1.0 / temp2, 1.0 / self.student_temp)
        nb = B // tb
        grid = (nb, G, N // tn)   # batch tiles (parallel), crops, token tiles

        cls_spec = pl.BlockSpec((1, tb, D), lambda i, g, t: (g, i, 0))        # constant in t
        pat_spec = pl.BlockSpec((1, tb, tn, P), lambda i, g, t: (g, i, t, 0))
        # TODO(synk): set pipeline_mode=pl.Buffered(3) on the patch specs if xprof shows
        # exposed DMA after token tiling and the extra buffer still fits the VMEM budget.
        mask_spec = pl.BlockSpec((1, tb, tn, 1), lambda i, g, t: (g, i, t, 0))
        row_d = pl.BlockSpec((1, D), lambda i, g, t: (0, 0))
        row_p = pl.BlockSpec((1, P), lambda i, g, t: (0, 0))
        out_scalar = pl.BlockSpec((1, 1, 1), lambda i, g, t: (i, 0, 0))
        out_d = pl.BlockSpec((1, 1, D), lambda i, g, t: (i, 0, 0))
        out_p = pl.BlockSpec((1, 1, P), lambda i, g, t: (i, 0, 0))

        return pl.pallas_call(
            kernel,
            out_shape=(
                jax.ShapeDtypeStruct((nb, 1, 1), jnp.float32),   # loss1 partials (cls)
                jax.ShapeDtypeStruct((nb, 1, 1), jnp.float32),   # loss2 partials (patch)
                jax.ShapeDtypeStruct((nb, 1, D), jnp.float32),   # teacher cls raw sums
                jax.ShapeDtypeStruct((nb, 1, P), jnp.float32),   # teacher patch raw sums
            ),
            grid=grid,
            in_specs=[cls_spec, cls_spec, row_d, pat_spec, pat_spec, row_p, mask_spec],
            out_specs=(out_scalar, out_scalar, out_d, out_p),
            scratch_shapes=[
                pltpu.VMEM((tb, D), jnp.float32),   # sum_q teacher cls softmax
                pltpu.VMEM((tb, D), jnp.float32),   # sum_v student cls log-softmax
                pltpu.VMEM((tb, 1), jnp.float32),   # masked-CE numerator accumulator
                pltpu.VMEM((tb, 1), jnp.float32),   # keep-count accumulator
            ],
            compiler_params=pltpu.CompilerParams(
                dimension_semantics=("parallel", "arbitrary", "arbitrary"),
                vmem_limit_bytes=vmem_limit,
            ),
        )

    # ------------------------------------------------------------------ #
    def __call__(self, student_output, teacher_output, student_mask, epoch,
                 mae_loss, similarity_loss, kl_distance_loss):
        student_cls, student_patch = student_output
        teacher_cls, teacher_patch = teacher_output

        G = self.ngcrops
        GB, D = teacher_cls.shape
        B = GB // G
        _, N, P = teacher_patch.shape

        temp = float(self.teacher_temp_schedule[epoch])
        temp2 = float(self.teacher_temp2_schedule[epoch])

        # crop-major views (chunk(i) == x[i]); keep the NATIVE dtype so bf16 streams
        # at half the HBM bytes — the kernel casts per tile after DMA.
        t_cls = teacher_cls.reshape(G, B, D)
        s_cls = student_cls.reshape(self.ncrops, B, D)[:G]   # only first G chunks enter the loss (spec)
        t_pat = teacher_patch.reshape(G, B, N, P)
        s_pat = student_patch.reshape(G, B, N, P)
        mask = jnp.stack([m.astype(jnp.float32) for m in student_mask], axis=0)
        mask = mask.reshape(G, B, N, 1)
        center = self.center.astype(jnp.float32)                   # (1, D)
        center2 = self.center2.reshape(1, P).astype(jnp.float32)   # (1, P)

        cls_in_itemsize = t_cls.dtype.itemsize + s_cls.dtype.itemsize
        pat_in_itemsize = t_pat.dtype.itemsize + s_pat.dtype.itemsize
        tb_mult = max(_sublane_multiple(t_cls.dtype), _sublane_multiple(s_cls.dtype))
        tn_mult = max(_sublane_multiple(t_pat.dtype), _sublane_multiple(s_pat.dtype))
        vmem_limit, _ = _vmem_budgets()
        tb, tn = self._select_tiles(B, N, D, P, cls_in_itemsize, pat_in_itemsize,
                                    tb_mult, tn_mult)

        key = (G, B, N, P, D, tb, tn, temp, temp2,
               str(t_cls.dtype), str(s_cls.dtype), str(t_pat.dtype), str(s_pat.dtype))
        fn = self._cache.get(key)
        if fn is None:
            fn = self._build(G, B, N, P, D, tb, tn, temp, temp2, vmem_limit)
            self._cache[key] = fn

        loss1_p, loss2_p, csum_p, c2sum_p = fn(
            t_cls, s_cls, center, t_pat, s_pat, center2, mask)

        # Tiny per-batch-tile partial reductions + scaling in plain XLA.
        n_terms1 = G * (G - 1) if G > 1 else 1
        total_loss1 = jnp.sum(loss1_p) * (self.lambda1 * 0.02 / (B * n_terms1))
        total_loss2 = jnp.sum(loss2_p) * (self.lambda2 * 0.02 / (B * G))

        kl_distance_loss = kl_distance_loss * 0.1
        similarity_loss = similarity_loss * 2
        total = dict(
            cls=total_loss1,
            patch=total_loss2,
            mae=mae_loss,
            similarity=similarity_loss,
            kl=kl_distance_loss,
            loss=total_loss1 + total_loss2 + mae_loss + similarity_loss + kl_distance_loss,
        )

        # update_center (EMA on buffers).
        # TODO(synk): dist.all_reduce over data-parallel replicas omitted (world_size == 1).
        cls_sum = jnp.sum(csum_p, axis=0)            # (1, D)
        pat_sum = jnp.sum(c2sum_p, axis=0)           # (1, P)
        self.center = center * self.center_momentum \
            + cls_sum * ((1.0 - self.center_momentum) / (G * B))
        new_center2 = center2 * self.center_momentum2 \
            + pat_sum * ((1.0 - self.center_momentum2) / (G * B * N))
        self.center2 = new_center2.reshape(1, 1, P)
        return total


# ---------------------------- pure-JAX reference ----------------------------
def _reference(student_cls, student_patch, teacher_cls, teacher_patch, masks,
               center, center2, temp, temp2, st, l1, l2, G, ncrops, B):
    s_cls = student_cls / st
    s_cls_c = [s_cls[i * B:(i + 1) * B] for i in range(ncrops)]
    s_pat = student_patch / st
    s_pat_c = [s_pat[i * B:(i + 1) * B] for i in range(G)]
    t_cls_sm = jax.nn.softmax((teacher_cls - center) / temp, axis=-1)
    t_cls_c = [t_cls_sm[i * B:(i + 1) * B] for i in range(G)]
    t_pat_sm = jax.nn.softmax((teacher_patch - center2) / temp2, axis=-1)
    t_pat_c = [t_pat_sm[i * B:(i + 1) * B] for i in range(G)]
    tl1, n1, tl2, n2 = 0.0, 0, 0.0, 0
    for q in range(G):
        for v in range(G):
            if v == q:
                l = jnp.sum(-t_pat_c[q] * jax.nn.log_softmax(s_pat_c[v], axis=-1), axis=-1)
                keep = 1.0 - masks[v].astype(jnp.float32)
                l = jnp.sum(l * keep, axis=-1) / jnp.maximum(jnp.sum(keep, axis=-1), 1.0)
                tl2 = tl2 + l.mean(); n2 += 1
            else:
                l = jnp.sum(-t_cls_c[q] * jax.nn.log_softmax(s_cls_c[v], axis=-1), axis=-1)
                tl1 = tl1 + l.mean(); n1 += 1
    return tl1 / n1 * l1 * 0.02, tl2 / n2 * l2 * 0.02


def _run_case(B, N, out_dim, patch_out_dim, ngcrops, nlcrops, epoch,
              batch_tile, token_tile, seed):
    ncrops = ngcrops + nlcrops
    mod = VehicleMAELoss(out_dim, patch_out_dim, ngcrops, nlcrops,
                         warmup_teacher_temp=0.04, teacher_temp=0.07,
                         warmup_teacher_temp2=0.04, teacher_temp2=0.07,
                         warmup_teacher_temp_epochs=5, nepochs=10,
                         batch_tile=batch_tile, token_tile=token_tile)

    key = jax.random.PRNGKey(seed)
    k1, k2, k3, k4, k5 = jax.random.split(key, 5)
    student_cls = jax.random.normal(k1, (ncrops * B, out_dim), jnp.float32)
    student_patch = jax.random.normal(k2, (ngcrops * B, N, patch_out_dim), jnp.float32)
    teacher_cls = jax.random.normal(k3, (ngcrops * B, out_dim), jnp.float32)
    teacher_patch = jax.random.normal(k4, (ngcrops * B, N, patch_out_dim), jnp.float32)
    student_mask = [jax.random.bernoulli(k, 0.4, (B, N))
                    for k in jax.random.split(k5, ngcrops)]
    mae_loss = jnp.float32(0.5)
    similarity_loss = jnp.float32(0.25)
    kl_distance_loss = jnp.float32(0.1)

    center0, center2_0 = mod.center, mod.center2
    out = mod((student_cls, student_patch), (teacher_cls, teacher_patch),
              student_mask, epoch, mae_loss, similarity_loss, kl_distance_loss)
    out = jax.tree_util.tree_map(jax.block_until_ready, out)

    temp = float(mod.teacher_temp_schedule[epoch])
    temp2 = float(mod.teacher_temp2_schedule[epoch])
    ref1, ref2 = _reference(student_cls, student_patch, teacher_cls, teacher_patch,
                            student_mask, center0, center2_0, temp, temp2,
                            mod.student_temp, mod.lambda1, mod.lambda2,
                            ngcrops, ncrops, B)
    np.testing.assert_allclose(np.array(out["cls"]), np.array(ref1), rtol=5e-4, atol=1e-6)
    np.testing.assert_allclose(np.array(out["patch"]), np.array(ref2), rtol=5e-4, atol=1e-6)

    ref_center = center0 * 0.9 + jnp.mean(teacher_cls, axis=0, keepdims=True) * 0.1
    ref_center2 = center2_0 * 0.9 + jnp.mean(teacher_patch.mean(1), axis=0)[None, None, :] * 0.1
    np.testing.assert_allclose(np.array(mod.center), np.array(ref_center), rtol=1e-5, atol=1e-6)
    np.testing.assert_allclose(np.array(mod.center2), np.array(ref_center2), rtol=1e-5, atol=1e-6)


if __name__ == "__main__":
    # Case 1: small module-consistent shapes, auto tile selection (grid = (1, G, 1)).
    _run_case(B=2, N=8, out_dim=32, patch_out_dim=32,
              ngcrops=2, nlcrops=2, epoch=3, batch_tile=None, token_tile=None, seed=0)
    # Case 2: forced batch + token tiling (tb=8, tn=8 -> grid = (2, G, 2)) to exercise
    # the streaming accumulators, per-batch-tile partials and the cross-term path.
    _run_case(B=16, N=16, out_dim=32, patch_out_dim=128,
              ngcrops=2, nlcrops=2, epoch=3, batch_tile=8, token_tile=8, seed=1)
    print("KERNEL_OK")
</pallas_src>

<mosaic_0001>
module attributes {stable_mosaic.version = 11 : i64} {
  func.func @kernel(%arg0: i32, %arg1: i32, %arg2: i32, %arg3: memref<1x2x32xf32, #tpu.memory_space<vmem>>, %arg4: memref<1x2x32xf32, #tpu.memory_space<vmem>>, %arg5: memref<1x32xf32, #tpu.memory_space<vmem>>, %arg6: memref<1x2x8x32xf32, #tpu.memory_space<vmem>>, %arg7: memref<1x2x8x32xf32, #tpu.memory_space<vmem>>, %arg8: memref<1x32xf32, #tpu.memory_space<vmem>>, %arg9: memref<1x2x8x1xf32, #tpu.memory_space<vmem>>, %arg10: memref<1x1x1xf32, #tpu.memory_space<vmem>>, %arg11: memref<1x1x1xf32, #tpu.memory_space<vmem>>, %arg12: memref<1x1x32xf32, #tpu.memory_space<vmem>>, %arg13: memref<1x1x32xf32, #tpu.memory_space<vmem>>, %arg14: memref<2x32xf32, #tpu.memory_space<vmem>>, %arg15: memref<2x32xf32, #tpu.memory_space<vmem>>, %arg16: memref<2x1xf32, #tpu.memory_space<vmem>>, %arg17: memref<2x1xf32, #tpu.memory_space<vmem>>) attributes {dimension_semantics = [#tpu.dimension_semantics<parallel>, #tpu.dimension_semantics<arbitrary>, #tpu.dimension_semantics<arbitrary>], iteration_bounds = array<i64: 1, 2, 1>, scalar_prefetch = 0 : i64, scratch_operands = 4 : i64, tpu.core_type = #tpu.core_type<tc>, window_params = [{transform_indices = @transform_0, window_bounds = array<i64: 1, 2, 32>}, {transform_indices = @transform_1, window_bounds = array<i64: 1, 2, 32>}, {pipeline_mode = #tpu.pipeline_mode<synchronous>, transform_indices = @transform_2, window_bounds = array<i64: 1, 32>}, {transform_indices = @transform_3, window_bounds = array<i64: 1, 2, 8, 32>}, {transform_indices = @transform_4, window_bounds = array<i64: 1, 2, 8, 32>}, {pipeline_mode = #tpu.pipeline_mode<synchronous>, transform_indices = @transform_5, window_bounds = array<i64: 1, 32>}, {transform_indices = @transform_6, window_bounds = array<i64: 1, 2, 8, 1>}, {transform_indices = @transform_7, window_bounds = array<i64: 1, 1, 1>}, {transform_indices = @transform_8, window_bounds = array<i64: 1, 1, 1>}, {transform_indices = @transform_9, window_bounds = array<i64: 1, 1, 32>}, {transform_indices = @transform_10, window_bounds = array<i64: 1, 1, 32>}]} {
    %c0_i32 = arith.constant 0 : i32
    %0 = arith.cmpi eq, %arg1, %c0_i32 : i32
    %c0_i32_0 = arith.constant 0 : i32
    %1 = arith.cmpi eq, %arg2, %c0_i32_0 : i32
    %2 = arith.andi %0, %1 : i1
    %3 = arith.extui %2 : i1 to i32
    %c0_i32_1 = arith.constant 0 : i32
    %4 = arith.cmpi ne, %3, %c0_i32_1 : i32
    scf.if %4 {
      %cst_46 = arith.constant 0.000000e+00 : f32
      %71 = vector.broadcast %cst_46 : f32 to vector<1x1x1xf32>
      %c0_47 = arith.constant 0 : index
      %c0_48 = arith.constant 0 : index
      %c0_49 = arith.constant 0 : index
      %72 = vector.load %arg10[%c0_47, %c0_48, %c0_49] : memref<1x1x1xf32, #tpu.memory_space<vmem>>, vector<1x1x1xf32>
      tpu.vector_store %arg10[%c0_47, %c0_48, %c0_49], %71 {strides = array<i32>} : memref<1x1x1xf32, #tpu.memory_space<vmem>>, vector<1x1x1xf32>,
      %cst_50 = arith.constant 0.000000e+00 : f32
      %73 = vector.broadcast %cst_50 : f32 to vector<1x1x1xf32>
      %c0_51 = arith.constant 0 : index
      %c0_52 = arith.constant 0 : index
      %c0_53 = arith.constant 0 : index
      %74 = vector.load %arg11[%c0_51, %c0_52, %c0_53] : memref<1x1x1xf32, #tpu.memory_space<vmem>>, vector<1x1x1xf32>
      tpu.vector_store %arg11[%c0_51, %c0_52, %c0_53], %73 {strides = array<i32>} : memref<1x1x1xf32, #tpu.memory_space<vmem>>, vector<1x1x1xf32>,
      %cst_54 = arith.constant 0.000000e+00 : f32
      %75 = vector.broadcast %cst_54 : f32 to vector<1x1x32xf32>
      %c0_55 = arith.constant 0 : index
      %c0_56 = arith.constant 0 : index
      %c0_57 = arith.constant 0 : index
      %76 = vector.load %arg12[%c0_55, %c0_56, %c0_57] : memref<1x1x32xf32, #tpu.memory_space<vmem>>, vector<1x1x32xf32>
      tpu.vector_store %arg12[%c0_55, %c0_56, %c0_57], %75 {strides = array<i32>} : memref<1x1x32xf32, #tpu.memory_space<vmem>>, vector<1x1x32xf32>,
      %cst_58 = arith.constant 0.000000e+00 : f32
      %77 = vector.broadcast %cst_58 : f32 to vector<1x1x32xf32>
      %c0_59 = arith.constant 0 : index
      %c0_60 = arith.constant 0 : index
      %c0_61 = arith.constant 0 : index
      %78 = vector.load %arg13[%c0_59, %c0_60, %c0_61] : memref<1x1x32xf32, #tpu.memory_space<vmem>>, vector<1x1x32xf32>
      tpu.vector_store %arg13[%c0_59, %c0_60, %c0_61], %77 {strides = array<i32>} : memref<1x1x32xf32, #tpu.memory_space<vmem>>, vector<1x1x32xf32>,
      %cst_62 = arith.constant 0.000000e+00 : f32
      %79 = vector.broadcast %cst_62 : f32 to vector<2x32xf32>
      %c0_63 = arith.constant 0 : index
      %c0_64 = arith.constant 0 : index
      %80 = vector.load %arg14[%c0_63, %c0_64] : memref<2x32xf32, #tpu.memory_space<vmem>>, vector<2x32xf32>
      tpu.vector_store %arg14[%c0_63, %c0_64], %79 {strides = array<i32>} : memref<2x32xf32, #tpu.memory_space<vmem>>, vector<2x32xf32>,
      %cst_65 = arith.constant 0.000000e+00 : f32
      %81 = vector.broadcast %cst_65 : f32 to vector<2x32xf32>
      %c0_66 = arith.constant 0 : index
      %c0_67 = arith.constant 0 : index
      %82 = vector.load %arg15[%c0_66, %c0_67] : memref<2x32xf32, #tpu.memory_space<vmem>>, vector<2x32xf32>
      tpu.vector_store %arg15[%c0_66, %c0_67], %81 {strides = array<i32>} : memref<2x32xf32, #tpu.memory_space<vmem>>, vector<2x32xf32>,
    } else {
    }
    %c0_i32_2 = arith.constant 0 : i32
    %5 = arith.cmpi eq, %arg2, %c0_i32_2 : i32
    %6 = arith.extui %5 : i1 to i32
    %c0_i32_3 = arith.constant 0 : i32
    %7 = arith.cmpi ne, %6, %c0_i32_3 : i32
    scf.if %7 {
      %cst_46 = arith.constant 0.000000e+00 : f32
      %71 = vector.broadcast %cst_46 : f32 to vector<2x1xf32>
      %c0_47 = arith.constant 0 : index
      %c0_48 = arith.constant 0 : index
      %72 = vector.load %arg16[%c0_47, %c0_48] : memref<2x1xf32, #tpu.memory_space<vmem>>, vector<2x1xf32>
      tpu.vector_store %arg16[%c0_47, %c0_48], %71 {strides = array<i32>} : memref<2x1xf32, #tpu.memory_space<vmem>>, vector<2x1xf32>,
      %cst_49 = arith.constant 0.000000e+00 : f32
      %73 = vector.broadcast %cst_49 : f32 to vector<2x1xf32>
      %c0_50 = arith.constant 0 : index
      %c0_51 = arith.constant 0 : index
      %74 = vector.load %arg17[%c0_50, %c0_51] : memref<2x1xf32, #tpu.memory_space<vmem>>, vector<2x1xf32>
      tpu.vector_store %arg17[%c0_50, %c0_51], %73 {strides = array<i32>} : memref<2x1xf32, #tpu.memory_space<vmem>>, vector<2x1xf32>,
      %c0_52 = arith.constant 0 : index
      %c0_53 = arith.constant 0 : index
      %c0_54 = arith.constant 0 : index
      %75 = vector.load %arg3[%c0_52, %c0_53, %c0_54] : memref<1x2x32xf32, #tpu.memory_space<vmem>>, vector<1x2x32xf32>
      %76 = vector.shape_cast %75 : vector<1x2x32xf32> to vector<2x32xf32>
      %c0_55 = arith.constant 0 : index
      %c0_56 = arith.constant 0 : index
      %c0_57 = arith.constant 0 : index
      %77 = vector.load %arg4[%c0_55, %c0_56, %c0_57] : memref<1x2x32xf32, #tpu.memory_space<vmem>>, vector<1x2x32xf32>
      %78 = vector.shape_cast %77 : vector<1x2x32xf32> to vector<2x32xf32>
      %c0_58 = arith.constant 0 : index
      %c0_59 = arith.constant 0 : index
      %79 = vector.load %arg5[%c0_58, %c0_59] : memref<1x32xf32, #tpu.memory_space<vmem>>, vector<1x32xf32>
      %80 = vector.broadcast %79 : vector<1x32xf32> to vector<2x32xf32>
      %81 = arith.subf %76, %80 : vector<2x32xf32>
      %cst_60 = arith.constant 1.600000e+01 : f32
      %82 = vector.broadcast %cst_60 : f32 to vector<2x32xf32>
      %83 = arith.mulf %81, %82 : vector<2x32xf32>
      %cst_61 = arith.constant dense<0xFF800000> : vector<2xf32>
      %84 = vector.multi_reduction <maximumf>, %83, %cst_61 [1] : vector<2x32xf32> to vector<2xf32>
      %85 = vector.shape_cast %84 : vector<2xf32> to vector<2x1xf32>
      %86 = vector.broadcast %85 : vector<2x1xf32> to vector<2x32xf32>
      %87 = arith.subf %83, %86 : vector<2x32xf32>
      %88 = math.exp %87 : vector<2x32xf32>
      %cst_62 = arith.constant dense<0.000000e+00> : vector<2xf32>
      %89 = vector.multi_reduction <add>, %88, %cst_62 [1] : vector<2x32xf32> to vector<2xf32>
      %90 = vector.shape_cast %89 : vector<2xf32> to vector<2x1xf32>
      %91 = tpu.reciprocal %90 {approx = true} : vector<2x1xf32> -> vector<2x1xf32>
      %92 = arith.mulf %90, %91 : vector<2x1xf32>
      %cst_63 = arith.constant 2.000000e+00 : f32
      %93 = vector.broadcast %cst_63 : f32 to vector<2x1xf32>
      %94 = arith.subf %93, %92 : vector<2x1xf32>
      %95 = arith.mulf %91, %94 : vector<2x1xf32>
      %96 = vector.broadcast %95 : vector<2x1xf32> to vector<2x32xf32>
      %97 = arith.mulf %88, %96 : vector<2x32xf32>
      %cst_64 = arith.constant 1.000000e+01 : f32
      %98 = vector.broadcast %cst_64 : f32 to vector<2x32xf32>
      %99 = arith.mulf %78, %98 : vector<2x32xf32>
      %cst_65 = arith.constant dense<0xFF800000> : vector<2xf32>
      %100 = vector.multi_reduction <maximumf>, %99, %cst_65 [1] : vector<2x32xf32> to vector<2xf32>
      %101 = vector.shape_cast %100 : vector<2xf32> to vector<2x1xf32>
      %102 = vector.broadcast %101 : vector<2x1xf32> to vector<2x32xf32>
      %103 = arith.subf %99, %102 : vector<2x32xf32>
      %104 = math.exp %103 : vector<2x32xf32>
      %cst_66 = arith.constant dense<0.000000e+00> : vector<2xf32>
      %105 = vector.multi_reduction <add>, %104, %cst_66 [1] : vector<2x32xf32> to vector<2xf32>
      %106 = vector.shape_cast %105 : vector<2xf32> to vector<2x1xf32>
      %107 = math.log %106 : vector<2x1xf32>
      %108 = vector.broadcast %107 : vector<2x1xf32> to vector<2x32xf32>
      %109 = arith.subf %103, %108 : vector<2x32xf32>
      %c0_67 = arith.constant 0 : index
      %c0_68 = arith.constant 0 : index
      %c0_69 = arith.constant 0 : index
      %110 = vector.load %arg10[%c0_67, %c0_68, %c0_69] : memref<1x1x1xf32, #tpu.memory_space<vmem>>, vector<1x1x1xf32>
      %111 = arith.mulf %97, %109 : vector<2x32xf32>
      %112 = vector.shape_cast %111 : vector<2x32xf32> to vector<1x2x32xf32>
      %cst_70 = arith.constant dense<0.000000e+00> : vector<1xf32>
      %113 = vector.multi_reduction <add>, %112, %cst_70 [1, 2] : vector<1x2x32xf32> to vector<1xf32>
      %114 = vector.shape_cast %113 : vector<1xf32> to vector<1x1x1xf32>
      %115 = vector.extract %114[0, 0, 0] : f32 from vector<1x1x1xf32>
      %116 = vector.broadcast %115 : f32 to vector<1x1x1xf32>
      %117 = arith.addf %110, %116 : vector<1x1x1xf32>
      %c0_71 = arith.constant 0 : index
      %c0_72 = arith.constant 0 : index
      %c0_73 = arith.constant 0 : index
      %118 = vector.load %arg10[%c0_71, %c0_72, %c0_73] : memref<1x1x1xf32, #tpu.memory_space<vmem>>, vector<1x1x1xf32>
      tpu.vector_store %arg10[%c0_71, %c0_72, %c0_73], %117 {strides = array<i32>} : memref<1x1x1xf32, #tpu.memory_space<vmem>>, vector<1x1x1xf32>,
      %c0_74 = arith.constant 0 : index
      %c0_75 = arith.constant 0 : index
      %119 = vector.load %arg14[%c0_74, %c0_75] : memref<2x32xf32, #tpu.memory_space<vmem>>, vector<2x32xf32>
      %120 = arith.addf %119, %97 : vector<2x32xf32>
      %c0_76 = arith.constant 0 : index
      %c0_77 = arith.constant 0 : index
      %121 = vector.load %arg14[%c0_76, %c0_77] : memref<2x32xf32, #tpu.memory_space<vmem>>, vector<2x32xf32>
      tpu.vector_store %arg14[%c0_76, %c0_77], %120 {strides = array<i32>} : memref<2x32xf32, #tpu.memory_space<vmem>>, vector<2x32xf32>,
      %c0_78 = arith.constant 0 : index
      %c0_79 = arith.constant 0 : index
      %122 = vector.load %arg15[%c0_78, %c0_79] : memref<2x32xf32, #tpu.memory_space<vmem>>, vector<2x32xf32>
      %123 = arith.addf %122, %109 : vector<2x32xf32>
      %c0_80 = arith.constant 0 : index
      %c0_81 = arith.constant 0 : index
      %124 = vector.load %arg15[%c0_80, %c0_81] : memref<2x32xf32, #tpu.memory_space<vmem>>, vector<2x32xf32>
      tpu.vector_store %arg15[%c0_80, %c0_81], %123 {strides = array<i32>} : memref<2x32xf32, #tpu.memory_space<vmem>>, vector<2x32xf32>,
      %c0_82 = arith.constant 0 : index
      %c0_83 = arith.constant 0 : index
      %c0_84 = arith.constant 0 : index
      %125 = vector.load %arg12[%c0_82, %c0_83, %c0_84] : memref<1x1x32xf32, #tpu.memory_space<vmem>>, vector<1x1x32xf32>
      %cst_85 = arith.constant dense<0.000000e+00> : vector<32xf32>
      %126 = vector.multi_reduction <add>, %76, %cst_85 [0] : vector<2x32xf32> to vector<32xf32>
      %127 = vector.shape_cast %126 : vector<32xf32> to vector<1x32xf32>
      %128 = vector.shape_cast %127 : vector<1x32xf32> to vector<1x1x32xf32>
      %129 = arith.addf %125, %128 : vector<1x1x32xf32>
      %c0_86 = arith.constant 0 : index
      %c0_87 = arith.constant 0 : index
      %c0_88 = arith.constant 0 : index
      %130 = vector.load %arg12[%c0_86, %c0_87, %c0_88] : memref<1x1x32xf32, #tpu.memory_space<vmem>>, vector<1x1x32xf32>
      tpu.vector_store %arg12[%c0_86, %c0_87, %c0_88], %129 {strides = array<i32>} : memref<1x1x32xf32, #tpu.memory_space<vmem>>, vector<1x1x32xf32>,
    } else {
    }
    %c0_i32_4 = arith.constant 0 : i32
    %8 = arith.cmpi eq, %arg2, %c0_i32_4 : i32
    %c1_i32 = arith.constant 1 : i32
    %9 = arith.cmpi eq, %arg1, %c1_i32 : i32
    %10 = arith.andi %8, %9 : i1
    %11 = arith.extui %10 : i1 to i32
    %c0_i32_5 = arith.constant 0 : i32
    %12 = arith.cmpi ne, %11, %c0_i32_5 : i32
    scf.if %12 {
      %c0_46 = arith.constant 0 : index
      %c0_47 = arith.constant 0 : index
      %c0_48 = arith.constant 0 : index
      %71 = vector.load %arg10[%c0_46, %c0_47, %c0_48] : memref<1x1x1xf32, #tpu.memory_space<vmem>>, vector<1x1x1xf32>
      %c0_49 = arith.constant 0 : index
      %c0_50 = arith.constant 0 : index
      %72 = vector.load %arg14[%c0_49, %c0_50] : memref<2x32xf32, #tpu.memory_space<vmem>>, vector<2x32xf32>
      %c0_51 = arith.constant 0 : index
      %c0_52 = arith.constant 0 : index
      %73 = vector.load %arg15[%c0_51, %c0_52] : memref<2x32xf32, #tpu.memory_space<vmem>>, vector<2x32xf32>
      %74 = arith.mulf %72, %73 : vector<2x32xf32>
      %75 = vector.shape_cast %74 : vector<2x32xf32> to vector<1x2x32xf32>
      %cst_53 = arith.constant dense<0.000000e+00> : vector<1xf32>
      %76 = vector.multi_reduction <add>, %75, %cst_53 [1, 2] : vector<1x2x32xf32> to vector<1xf32>
      %77 = vector.shape_cast %76 : vector<1xf32> to vector<1x1x1xf32>
      %78 = vector.extract %77[0, 0, 0] : f32 from vector<1x1x1xf32>
      %79 = vector.broadcast %78 : f32 to vector<1x1x1xf32>
      %80 = arith.subf %71, %79 : vector<1x1x1xf32>
      %c0_54 = arith.constant 0 : index
      %c0_55 = arith.constant 0 : index
      %c0_56 = arith.constant 0 : index
      %81 = vector.load %arg10[%c0_54, %c0_55, %c0_56] : memref<1x1x1xf32, #tpu.memory_space<vmem>>, vector<1x1x1xf32>
      tpu.vector_store %arg10[%c0_54, %c0_55, %c0_56], %80 {strides = array<i32>} : memref<1x1x1xf32, #tpu.memory_space<vmem>>, vector<1x1x1xf32>,
    } else {
    }
    %c0 = arith.constant 0 : index
    %c0_6 = arith.constant 0 : index
    %c0_7 = arith.constant 0 : index
    %c0_8 = arith.constant 0 : index
    %13 = vector.load %arg6[%c0, %c0_6, %c0_7, %c0_8] : memref<1x2x8x32xf32, #tpu.memory_space<vmem>>, vector<1x2x8x32xf32>
    %14 = vector.shape_cast %13 : vector<1x2x8x32xf32> to vector<2x8x32xf32>
    %c0_9 = arith.constant 0 : index
    %c0_10 = arith.constant 0 : index
    %c0_11 = arith.constant 0 : index
    %c0_12 = arith.constant 0 : index
    %15 = vector.load %arg7[%c0_9, %c0_10, %c0_11, %c0_12] : memref<1x2x8x32xf32, #tpu.memory_space<vmem>>, vector<1x2x8x32xf32>
    %16 = vector.shape_cast %15 : vector<1x2x8x32xf32> to vector<2x8x32xf32>
    %c0_13 = arith.constant 0 : index
    %c0_14 = arith.constant 0 : index
    %17 = vector.load %arg8[%c0_13, %c0_14] : memref<1x32xf32, #tpu.memory_space<vmem>>, vector<1x32xf32>
    %c0_15 = arith.constant 0 : index
    %c0_16 = arith.constant 0 : index
    %c0_17 = arith.constant 0 : index
    %c0_18 = arith.constant 0 : index
    %18 = vector.load %arg9[%c0_15, %c0_16, %c0_17, %c0_18] : memref<1x2x8x1xf32, #tpu.memory_space<vmem>>, vector<1x2x8x1xf32>
    %19 = vector.shape_cast %18 : vector<1x2x8x1xf32> to vector<2x8x1xf32>
    %cst = arith.constant 1.000000e+00 : f32
    %20 = vector.broadcast %cst : f32 to vector<2x8x1xf32>
    %21 = arith.subf %20, %19 : vector<2x8x1xf32>
    %22 = vector.shape_cast %17 : vector<1x32xf32> to vector<1x1x32xf32>
    %23 = vector.broadcast %22 : vector<1x1x32xf32> to vector<2x8x32xf32>
    %24 = arith.subf %14, %23 : vector<2x8x32xf32>
    %cst_19 = arith.constant 1.600000e+01 : f32
    %25 = vector.broadcast %cst_19 : f32 to vector<2x8x32xf32>
    %26 = arith.mulf %24, %25 : vector<2x8x32xf32>
    %cst_20 = arith.constant dense<0xFF800000> : vector<2x8xf32>
    %27 = vector.multi_reduction <maximumf>, %26, %cst_20 [2] : vector<2x8x32xf32> to vector<2x8xf32>
    %28 = vector.shape_cast %27 : vector<2x8xf32> to vector<2x8x1xf32>
    %29 = vector.broadcast %28 : vector<2x8x1xf32> to vector<2x8x32xf32>
    %30 = arith.subf %26, %29 : vector<2x8x32xf32>
    %31 = math.exp %30 : vector<2x8x32xf32>
    %cst_21 = arith.constant dense<0.000000e+00> : vector<2x8xf32>
    %32 = vector.multi_reduction <add>, %31, %cst_21 [2] : vector<2x8x32xf32> to vector<2x8xf32>
    %33 = vector.shape_cast %32 : vector<2x8xf32> to vector<2x8x1xf32>
    %cst_22 = arith.constant 1.000000e+01 : f32
    %34 = vector.broadcast %cst_22 : f32 to vector<2x8x32xf32>
    %35 = arith.mulf %16, %34 : vector<2x8x32xf32>
    %cst_23 = arith.constant dense<0xFF800000> : vector<2x8xf32>
    %36 = vector.multi_reduction <maximumf>, %35, %cst_23 [2] : vector<2x8x32xf32> to vector<2x8xf32>
    %37 = vector.shape_cast %36 : vector<2x8xf32> to vector<2x8x1xf32>
    %38 = vector.broadcast %37 : vector<2x8x1xf32> to vector<2x8x32xf32>
    %39 = arith.subf %35, %38 : vector<2x8x32xf32>
    %40 = math.exp %39 : vector<2x8x32xf32>
    %cst_24 = arith.constant dense<0.000000e+00> : vector<2x8xf32>
    %41 = vector.multi_reduction <add>, %40, %cst_24 [2] : vector<2x8x32xf32> to vector<2x8xf32>
    %42 = vector.shape_cast %41 : vector<2x8xf32> to vector<2x8x1xf32>
    %43 = math.log %42 : vector<2x8x1xf32>
    %44 = arith.mulf %31, %39 : vector<2x8x32xf32>
    %cst_25 = arith.constant dense<0.000000e+00> : vector<2x8xf32>
    %45 = vector.multi_reduction <add>, %44, %cst_25 [2] : vector<2x8x32xf32> to vector<2x8xf32>
    %46 = vector.shape_cast %45 : vector<2x8xf32> to vector<2x8x1xf32>
    %47 = tpu.reciprocal %33 {approx = true} : vector<2x8x1xf32> -> vector<2x8x1xf32>
    %48 = arith.mulf %33, %47 : vector<2x8x1xf32>
    %cst_26 = arith.constant 2.000000e+00 : f32
    %49 = vector.broadcast %cst_26 : f32 to vector<2x8x1xf32>
    %50 = arith.subf %49, %48 : vector<2x8x1xf32>
    %51 = arith.mulf %47, %50 : vector<2x8x1xf32>
    %52 = arith.mulf %46, %51 : vector<2x8x1xf32>
    %53 = arith.subf %43, %52 : vector<2x8x1xf32>
    %c0_27 = arith.constant 0 : index
    %c0_28 = arith.constant 0 : index
    %54 = vector.load %arg16[%c0_27, %c0_28] : memref<2x1xf32, #tpu.memory_space<vmem>>, vector<2x1xf32>
    %55 = arith.mulf %53, %21 : vector<2x8x1xf32>
    %cst_29 = arith.constant dense<0.000000e+00> : vector<2x1xf32>
    %56 = vector.multi_reduction <add>, %55, %cst_29 [1] : vector<2x8x1xf32> to vector<2x1xf32>
    %57 = arith.addf %54, %56 : vector<2x1xf32>
    %c0_30 = arith.constant 0 : index
    %c0_31 = arith.constant 0 : index
    %58 = vector.load %arg16[%c0_30, %c0_31] : memref<2x1xf32, #tpu.memory_space<vmem>>, vector<2x1xf32>
    tpu.vector_store %arg16[%c0_30, %c0_31], %57 {strides = array<i32>} : memref<2x1xf32, #tpu.memory_space<vmem>>, vector<2x1xf32>,
    %c0_32 = arith.constant 0 : index
    %c0_33 = arith.constant 0 : index
    %59 = vector.load %arg17[%c0_32, %c0_33] : memref<2x1xf32, #tpu.memory_space<vmem>>, vector<2x1xf32>
    %cst_34 = arith.constant dense<0.000000e+00> : vector<2x1xf32>
    %60 = vector.multi_reduction <add>, %21, %cst_34 [1] : vector<2x8x1xf32> to vector<2x1xf32>
    %61 = arith.addf %59, %60 : vector<2x1xf32>
    %c0_35 = arith.constant 0 : index
    %c0_36 = arith.constant 0 : index
    %62 = vector.load %arg17[%c0_35, %c0_36] : memref<2x1xf32, #tpu.memory_space<vmem>>, vector<2x1xf32>
    tpu.vector_store %arg17[%c0_35, %c0_36], %61 {strides = array<i32>} : memref<2x1xf32, #tpu.memory_space<vmem>>, vector<2x1xf32>,
    %c0_37 = arith.constant 0 : index
    %c0_38 = arith.constant 0 : index
    %c0_39 = arith.constant 0 : index
    %63 = vector.load %arg13[%c0_37, %c0_38, %c0_39] : memref<1x1x32xf32, #tpu.memory_space<vmem>>, vector<1x1x32xf32>
    %cst_40 = arith.constant dense<0.000000e+00> : vector<32xf32>
    %64 = vector.multi_reduction <add>, %14, %cst_40 [0, 1] : vector<2x8x32xf32> to vector<32xf32>
    %65 = vector.shape_cast %64 : vector<32xf32> to vector<1x1x32xf32>
    %66 = arith.addf %63, %65 : vector<1x1x32xf32>
    %c0_41 = arith.constant 0 : index
    %c0_42 = arith.constant 0 : index
    %c0_43 = arith.constant 0 : index
    %67 = vector.load %arg13[%c0_41, %c0_42, %c0_43] : memref<1x1x32xf32, #tpu.memory_space<vmem>>, vector<1x1x32xf32>
    tpu.vector_store %arg13[%c0_41, %c0_42, %c0_43], %66 {strides = array<i32>} : memref<1x1x32xf32, #tpu.memory_space<vmem>>, vector<1x1x32xf32>,
    %c0_i32_44 = arith.constant 0 : i32
    %68 = arith.cmpi eq, %arg2, %c0_i32_44 : i32
    %69 = arith.extui %68 : i1 to i32
    %c0_i32_45 = arith.constant 0 : i32
    %70 = arith.cmpi ne, %69, %c0_i32_45 : i32
    scf.if %70 {
      %c0_46 = arith.constant 0 : index
      %c0_47 = arith.constant 0 : index
      %71 = vector.load %arg16[%c0_46, %c0_47] : memref<2x1xf32, #tpu.memory_space<vmem>>, vector<2x1xf32>
      %c0_48 = arith.constant 0 : index
      %c0_49 = arith.constant 0 : index
      %72 = vector.load %arg17[%c0_48, %c0_49] : memref<2x1xf32, #tpu.memory_space<vmem>>, vector<2x1xf32>
      %cst_50 = arith.constant 1.000000e+00 : f32
      %73 = vector.broadcast %cst_50 : f32 to vector<2x1xf32>
      %74 = arith.maximumf %72, %73 : vector<2x1xf32>
      %75 = tpu.reciprocal %74 {approx = true} : vector<2x1xf32> -> vector<2x1xf32>
      %76 = arith.mulf %74, %75 : vector<2x1xf32>
      %cst_51 = arith.constant 2.000000e+00 : f32
      %77 = vector.broadcast %cst_51 : f32 to vector<2x1xf32>
      %78 = arith.subf %77, %76 : vector<2x1xf32>
      %79 = arith.mulf %75, %78 : vector<2x1xf32>
      %80 = arith.mulf %71, %79 : vector<2x1xf32>
      %c0_52 = arith.constant 0 : index
      %c0_53 = arith.constant 0 : index
      %c0_54 = arith.constant 0 : index
      %81 = vector.load %arg11[%c0_52, %c0_53, %c0_54] : memref<1x1x1xf32, #tpu.memory_space<vmem>>, vector<1x1x1xf32>
      %82 = vector.shape_cast %80 : vector<2x1xf32> to vector<1x2x1xf32>
      %cst_55 = arith.constant dense<0.000000e+00> : vector<1xf32>
      %83 = vector.multi_reduction <add>, %82, %cst_55 [1, 2] : vector<1x2x1xf32> to vector<1xf32>
      %84 = vector.shape_cast %83 : vector<1xf32> to vector<1x1x1xf32>
      %85 = vector.extract %84[0, 0, 0] : f32 from vector<1x1x1xf32>
      %86 = vector.broadcast %85 : f32 to vector<1x1x1xf32>
      %87 = arith.addf %81, %86 : vector<1x1x1xf32>
      %c0_56 = arith.constant 0 : index
      %c0_57 = arith.constant 0 : index
      %c0_58 = arith.constant 0 : index
      %88 = vector.load %arg11[%c0_56, %c0_57, %c0_58] : memref<1x1x1xf32, #tpu.memory_space<vmem>>, vector<1x1x1xf32>
      tpu.vector_store %arg11[%c0_56, %c0_57, %c0_58], %87 {strides = array<i32>} : memref<1x1x1xf32, #tpu.memory_space<vmem>>, vector<1x1x1xf32>,
    } else {
    }
    return
  }
  func.func @transform_0(%arg0: i32, %arg1: i32, %arg2: i32) -> (i32, i32, i32) {
    %c0_i32 = arith.constant 0 : i32
    %c0_i32_0 = arith.constant 0 : i32
    return %arg1, %arg0, %c0_i32 : i32, i32, i32
  }
  func.func @transform_1(%arg0: i32, %arg1: i32, %arg2: i32) -> (i32, i32, i32) {
    %c0_i32 = arith.constant 0 : i32
    %c0_i32_0 = arith.constant 0 : i32
    return %arg1, %arg0, %c0_i32 : i32, i32, i32
  }
  func.func @transform_2(%arg0: i32, %arg1: i32, %arg2: i32) -> (i32, i32) {
    %c0_i32 = arith.constant 0 : i32
    %c0_i32_0 = arith.constant 0 : i32
    %c0_i32_1 = arith.constant 0 : i32
    return %c0_i32, %c0_i32_0 : i32, i32
  }
  func.func @transform_3(%arg0: i32, %arg1: i32, %arg2: i32) -> (i32, i32, i32, i32) {
    %c0_i32 = arith.constant 0 : i32
    %c0_i32_0 = arith.constant 0 : i32
    return %arg1, %arg0, %arg2, %c0_i32 : i32, i32, i32, i32
  }
  func.func @transform_4(%arg0: i32, %arg1: i32, %arg2: i32) -> (i32, i32, i32, i32) {
    %c0_i32 = arith.constant 0 : i32
    %c0_i32_0 = arith.constant 0 : i32
    return %arg1, %arg0, %arg2, %c0_i32 : i32, i32, i32, i32
  }
  func.func @transform_5(%arg0: i32, %arg1: i32, %arg2: i32) -> (i32, i32) {
    %c0_i32 = arith.constant 0 : i32
    %c0_i32_0 = arith.constant 0 : i32
    %c0_i32_1 = arith.constant 0 : i32
    return %c0_i32, %c0_i32_0 : i32, i32
  }
  func.func @transform_6(%arg0: i32, %arg1: i32, %arg2: i32) -> (i32, i32, i32, i32) {
    %c0_i32 = arith.constant 0 : i32
    %c0_i32_0 = arith.constant 0 : i32
    return %arg1, %arg0, %arg2, %c0_i32 : i32, i32, i32, i32
  }
  func.func @transform_7(%arg0: i32, %arg1: i32, %arg2: i32) -> (i32, i32, i32) {
    %c0_i32 = arith.constant 0 : i32
    %c0_i32_0 = arith.constant 0 : i32
    %c0_i32_1 = arith.constant 0 : i32
    return %arg0, %c0_i32, %c0_i32_0 : i32, i32, i32
  }
  func.func @transform_8(%arg0: i32, %arg1: i32, %arg2: i32) -> (i32, i32, i32) {
    %c0_i32 = arith.constant 0 : i32
    %c0_i32_0 = arith.constant 0 : i32
    %c0_i32_1 = arith.constant 0 : i32
    return %arg0, %c0_i32, %c0_i32_0 : i32, i32, i32
  }
  func.func @transform_9(%arg0: i32, %arg1: i32, %arg2: i32) -> (i32, i32, i32) {
    %c0_i32 = arith.constant 0 : i32
    %c0_i32_0 = arith.constant 0 : i32
    %c0_i32_1 = arith.constant 0 : i32
    return %arg0, %c0_i32, %c0_i32_0 : i32, i32, i32
  }
  func.func @transform_10(%arg0: i32, %arg1: i32, %arg2: i32) -> (i32, i32, i32) {
    %c0_i32 = arith.constant 0 : i32
    %c0_i32_0 = arith.constant 0 : i32
    %c0_i32_1 = arith.constant 0 : i32
    return %arg0, %c0_i32, %c0_i32_0 : i32, i32, i32
  }
}

</mosaic_0001>

<llo_original>
// kernel: tpu_custom_call.1
$region0: #{tpu_custom_call.1}
  #allocation0 [shape = 'u32[]', space=smem, size = 0x4, offset = 0x4, fixed_abs, tag = 'smem constant byte address 0x4 - core index']
  #allocation1 [shape = 'u32[144,128]{1,0:T(1,128)}', space=vmem, size = 0x12000, scoped, tag = 'internal scratch']
  #allocation2 [shape = 'f32[2,32]{1,0:T(2,128)}', space=vmem, size = 0x400, scoped, tag = 'scratch operand']
  #allocation3 [shape = 'f32[2,32]{1,0:T(2,128)}', space=vmem, size = 0x400, scoped, tag = 'scratch operand']
  #allocation4 [shape = 'f32[2,1]{1,0:T(2,128)}', space=vmem, size = 0x400, scoped, tag = 'scratch operand']
  #allocation5 [shape = 'f32[2,1]{1,0:T(2,128)}', space=vmem, size = 0x400, scoped, tag = 'scratch operand']
  %s0 = inlined_call_operand.vmem [shape: f32[2,2,32], index: 0, kind: input, shape index: {}]
  %s1 = inlined_call_operand.vmem [shape: f32[2,2,32], index: 1, kind: input, shape index: {}]
  %s2 = inlined_call_operand.vmem [shape: f32[1,32], index: 2, kind: input, shape index: {}]
  %s3 = inlined_call_operand.vmem [shape: f32[2,2,8,32], index: 3, kind: input, shape index: {}]
  %s4 = inlined_call_operand.hbm [shape: f32[2,2,8,32], index: 4, kind: input, shape index: {}]
  %s5 = inlined_call_operand.vmem [shape: f32[1,32], index: 5, kind: input, shape index: {}]
  %s6 = inlined_call_operand.vmem [shape: f32[2,2,8,1], index: 6, kind: input, shape index: {}]
  %s7 = inlined_call_operand.hbm [shape: f32[1,1,1], index: 7, kind: output, shape index: {0}]
  %s8 = inlined_call_operand.hbm [shape: f32[1,1,1], index: 8, kind: output, shape index: {1}]
  %s9 = inlined_call_operand.hbm [shape: f32[1,1,32], index: 9, kind: output, shape index: {2}]
  %s10 = inlined_call_operand.hbm [shape: f32[1,1,32], index: 10, kind: output, shape index: {3}]
  %11 = xla_tuple %s7, %s8, %s9, %s10
  %s12 = sld [smem:[#allocation0]]
  $region105: #{tpu_custom_call.1} parent=0
    _
  %s14 = ssub.s32 1, %s12
  %s15 = scalar_select 0, %s14, %s12
  $region1: #{tpu_custom_call.1} parent=0
    #allocation6 [shape = 'u8[16384]{0}', space=vmem, size = 0x4000, scoped, tag = 'input window, operand 4']
    #allocation7 [shape = 's32[2]{0}', space=sflag, size = 0x8, scoped, tag = 'scoped memory for tpu_custom_call.1']
    #allocation8 [shape = 's32[2]{0}', space=sflag, size = 0x8, scoped, tag = 'scoped memory for tpu_custom_call.1']
    #allocation9 [shape = 'u8[512]{0}', space=vmem, size = 0x400, scoped, tag = 'output window, operand 0, single buffered']
    #allocation10 [shape = 'u8[512]{0}', space=vmem, size = 0x400, scoped, tag = 'output window, operand 1, single buffered']
    #allocation11 [shape = 's32[1]{0}', space=sflag, size = 0x4, scoped, tag = 'scoped memory for tpu_custom_call.1']
    #allocation12 [shape = 'u8[512]{0}', space=vmem, size = 0x400, scoped, tag = 'output window, operand 2, single buffered']
    #allocation13 [shape = 'u8[512]{0}', space=vmem, size = 0x400, scoped, tag = 'output window, operand 3, single buffered']
    #allocation14 [shape = 's32[1]{0}', space=sflag, size = 0x4, scoped, tag = 'scoped memory for tpu_custom_call.1']
    %16 = vsyncpa [#allocation7], 0
    %s17 = scalar_lea.sflag [#allocation7], 1
    %18 = vsyncpa %s17, 0
    %19 = vsyncpa [#allocation8], 0
    %20 = vsyncpa [#allocation11], 0
    %21 = vsyncpa [#allocation14], 0
    loop: start=0, step=1, limit=4
    $region2: #{tpu_custom_call.1} parent=1 // loop_pre_header
      _
    $region3: #{tpu_custom_call.1} parent=1 // loop_header
      %s23 = sphi 0, %s27
      %p24 = scmp.ge.s32.totalorder %s23, 4
      %s30 = sphi 0, %s49
      %s31 = sphi 0, %s45
      %s32 = sphi 0, %s41
      %s33 = sphi 0, %s30
      %s34 = sphi 0, %s31
      %s35 = sphi 0, %s32
      %s36 = sphi 0, %s33
      %s37 = sphi 0, %s34
      %s38 = sphi 0, %s35
      %s54 = sphi 0, %s56
      %s57 = sphi 0, %s54
      %s58 = sphi 0, %s57
      %s74 = sphi 0, %s58
      %s82 = sphi 0, %s84
      %s85 = sphi 0, %s82
      %s86 = sphi 0, %s85
      %s102 = sphi 0, %s86
      %s106 = sphi 0, %s106
      %s108 = sphi 0, %s106
      %s109 = sphi 0, %s108
      %s123 = sphi 0, %s109
      %s133 = sphi 0, %s135
      %s136 = sphi 0, %s133
      %s137 = sphi 0, %s136
      %s153 = sphi 0, %s137
      %s163 = sphi 0, %s165
      %s166 = sphi 0, %s163
      %s167 = sphi 0, %s166
      %s183 = sphi 0, %s167
      %s187 = sphi 0, %s187
      %s189 = sphi 0, %s187
      %s190 = sphi 0, %s189
      %s204 = sphi 0, %s190
      %s214 = sphi 0, %s216
      %s217 = sphi 0, %s214
      %s218 = sphi 0, %s217
      %s234 = sphi 0, %s218
      %s240 = sphi 0, %s242
      %s243 = sphi 0, %s240
      %s244 = sphi 0, %s243
      %s260 = sphi 0, %s244
      %s266 = sphi 0, %s268
      %s269 = sphi 0, %s266
      %s270 = sphi 0, %s269
      %s286 = sphi 0, %s270
      %s292 = sphi 0, %s294
      %s295 = sphi 0, %s292
      %s296 = sphi 0, %s295
      %s312 = sphi 0, %s296
      %s318 = sphi 0, %s320
      %s321 = sphi 0, %s318
      %s322 = sphi 0, %s321
      %s338 = sphi 0, %s322
    $region4: #{tpu_custom_call.1} parent=1 // loop_header_branch
      %26 = sbr.rel (%p24) target = $region8
    $region5: #{tpu_custom_call.1} parent=1 // loop_body
      %s28 = ssub.s32 %s23, 1
      %s29 = ssub.s32 %s23, 2
      %s39 = sadd.s32 1, %s32
      %p40 = scmp.ge.s32.totalorder %s39, 1
      %s41 = scalar_select %p40, 0, %s39
      %s42 = sadd.s32 1, %s31
      %s43 = scalar_select %p40, %s42, %s31
      %p44 = scmp.ge.s32.totalorder %s43, 2
      %s45 = scalar_select %p44, 0, %s43
      %s46 = sadd.s32 1, %s30
      %s47 = scalar_select %p44, %s46, %s30
      %p48 = scmp.ge.s32.totalorder %s47, 1
      %s49 = scalar_select %p48, 0, %s47
      %s50 = ssub.s32 %s31, %s45
      %s51 = ssub.s32 %s30, %s49
      %s52 = sor.u32 %s50, %s51
      %p53 = scmp.eq.s32.totalorder %s52, 0
      %s55 = sadd.s32 %s54, 1
      %s56 = scalar_select %p53, %s54, %s55
      %p59 = pneg %p53
      %p60 = scmp.eq.s32.totalorder %s23, 1
      %p61 = por %p59, %p60
      %p62 = scmp.ne.s32.totalorder %s54, %s57
      %p63 = scmp.eq.s32.totalorder %s23, 0
      %p64 = por %p62, %p63
      %p65 = scmp.ne.s32.totalorder %s54, %s57
      %p66 = scmp.eq.s32.totalorder %s28, 1
      %p67 = por %p65, %p66
      %p68 = scmp.ne.s32.totalorder %s57, %s58
      %p69 = scmp.eq.s32.totalorder %s28, 0
      %p70 = por %p68, %p69
      %p71 = scmp.ne.s32.totalorder %s57, %s58
      %p72 = scmp.eq.s32.totalorder %s29, 1
      %p73 = por %p71, %p72
      %p75 = scmp.ne.s32.totalorder %s58, %s74
      %p76 = scmp.eq.s32.totalorder %s29, 0
      %p77 = por %p75, %p76
      %s78 = ssub.s32 %s31, %s45
      %s79 = ssub.s32 %s30, %s49
      %s80 = sor.u32 %s78, %s79
      %p81 = scmp.eq.s32.totalorder %s80, 0
      %s83 = sadd.s32 %s82, 1
      %s84 = scalar_select %p81, %s82, %s83
      %p87 = pneg %p81
      %p88 = scmp.eq.s32.totalorder %s23, 1
      %p89 = por %p87, %p88
      %p90 = scmp.ne.s32.totalorder %s82, %s85
      %p91 = scmp.eq.s32.totalorder %s23, 0
      %p92 = por %p90, %p91
      %p93 = scmp.ne.s32.totalorder %s82, %s85
      %p94 = scmp.eq.s32.totalorder %s28, 1
      %p95 = por %p93, %p94
      %p96 = scmp.ne.s32.totalorder %s85, %s86
      %p97 = scmp.eq.s32.totalorder %s28, 0
      %p98 = por %p96, %p97
      %p99 = scmp.ne.s32.totalorder %s85, %s86
      %p100 = scmp.eq.s32.totalorder %s29, 1
      %p101 = por %p99, %p100
      %p103 = scmp.ne.s32.totalorder %s86, %s102
      %p104 = scmp.eq.s32.totalorder %s29, 0
      %p105 = por %p103, %p104
      %s107 = sadd.s32 %s106, 1
      %p110 = scmp.eq.s32.totalorder %s23, 1
      %p111 = scmp.ne.s32.totalorder %s106, %s108
      %p112 = scmp.eq.s32.totalorder %s23, 0
      %p113 = por %p111, %p112
      %p114 = scmp.ne.s32.totalorder %s106, %s108
      %p115 = scmp.eq.s32.totalorder %s28, 1
      %p116 = por %p114, %p115
      %p117 = scmp.ne.s32.totalorder %s108, %s109
      %p118 = scmp.eq.s32.totalorder %s28, 0
      %p119 = por %p117, %p118
      %p120 = scmp.ne.s32.totalorder %s108, %s109
      %p121 = scmp.eq.s32.totalorder %s29, 1
      %p122 = por %p120, %p121
      %p124 = scmp.ne.s32.totalorder %s109, %s123
      %p125 = scmp.eq.s32.totalorder %s29, 0
      %p126 = por %p124, %p125
      %s127 = ssub.s32 %s31, %s45
      %s128 = ssub.s32 %s30, %s49
      %s129 = sor.u32 %s127, %s128
      %s130 = ssub.s32 %s32, %s41
      %s131 = sor.u32 %s129, %s130
      %p132 = scmp.eq.s32.totalorder %s131, 0
      %s134 = sadd.s32 %s133, 1
      %s135 = scalar_select %p132, %s133, %s134
      %p138 = pneg %p132
      %p139 = scmp.eq.s32.totalorder %s23, 1
      %p140 = por %p138, %p139
      %p141 = scmp.ne.s32.totalorder %s133, %s136
      %p142 = scmp.eq.s32.totalorder %s23, 0
      %p143 = por %p141, %p142
      %p144 = scmp.ne.s32.totalorder %s133, %s136
      %p145 = scmp.eq.s32.totalorder %s28, 1
      %p146 = por %p144, %p145
      %p147 = scmp.ne.s32.totalorder %s136, %s137
      %p148 = scmp.eq.s32.totalorder %s28, 0
      %p149 = por %p147, %p148
      %p150 = scmp.ne.s32.totalorder %s136, %s137
      %p151 = scmp.eq.s32.totalorder %s29, 1
      %p152 = por %p150, %p151
      %p154 = scmp.ne.s32.totalorder %s137, %s153
      %p155 = scmp.eq.s32.totalorder %s29, 0
      %p156 = por %p154, %p155
      %s157 = ssub.s32 %s31, %s45
      %s158 = ssub.s32 %s30, %s49
      %s159 = sor.u32 %s157, %s158
      %s160 = ssub.s32 %s32, %s41
      %s161 = sor.u32 %s159, %s160
      %p162 = scmp.eq.s32.totalorder %s161, 0
      %s164 = sadd.s32 %s163, 1
      %s165 = scalar_select %p162, %s163, %s164
      %p168 = pneg %p162
      %p169 = scmp.eq.s32.totalorder %s23, 1
      %p170 = por %p168, %p169
      %p171 = scmp.ne.s32.totalorder %s163, %s166
      %p172 = scmp.eq.s32.totalorder %s23, 0
      %p173 = por %p171, %p172
      %p174 = scmp.ne.s32.totalorder %s163, %s166
      %p175 = scmp.eq.s32.totalorder %s28, 1
      %p176 = por %p174, %p175
      %p177 = scmp.ne.s32.totalorder %s166, %s167
      %p178 = scmp.eq.s32.totalorder %s28, 0
      %p179 = por %p177, %p178
      %p180 = scmp.ne.s32.totalorder %s166, %s167
      %p181 = scmp.eq.s32.totalorder %s29, 1
      %p182 = por %p180, %p181
      %p184 = scmp.ne.s32.totalorder %s167, %s183
      %p185 = scmp.eq.s32.totalorder %s29, 0
      %p186 = por %p184, %p185
      %s188 = sadd.s32 %s187, 1
      %p191 = scmp.eq.s32.totalorder %s23, 1
      %p192 = scmp.ne.s32.totalorder %s187, %s189
      %p193 = scmp.eq.s32.totalorder %s23, 0
      %p194 = por %p192, %p193
      %p195 = scmp.ne.s32.totalorder %s187, %s189
      %p196 = scmp.eq.s32.totalorder %s28, 1
      %p197 = por %p195, %p196
      %p198 = scmp.ne.s32.totalorder %s189, %s190
      %p199 = scmp.eq.s32.totalorder %s28, 0
      %p200 = por %p198, %p199
      %p201 = scmp.ne.s32.totalorder %s189, %s190
      %p202 = scmp.eq.s32.totalorder %s29, 1
      %p203 = por %p201, %p202
      %p205 = scmp.ne.s32.totalorder %s190, %s204
      %p206 = scmp.eq.s32.totalorder %s29, 0
      %p207 = por %p205, %p206
      %s208 = ssub.s32 %s31, %s45
      %s209 = ssub.s32 %s30, %s49
      %s210 = sor.u32 %s208, %s209
      %s211 = ssub.s32 %s32, %s41
      %s212 = sor.u32 %s210, %s211
      %p213 = scmp.eq.s32.totalorder %s212, 0
      %s215 = sadd.s32 %s214, 1
      %s216 = scalar_select %p213, %s214, %s215
      %p219 = pneg %p213
      %p220 = scmp.eq.s32.totalorder %s23, 1
      %p221 = por %p219, %p220
      %p222 = scmp.ne.s32.totalorder %s214, %s217
      %p223 = scmp.eq.s32.totalorder %s23, 0
      %p224 = por %p222, %p223
      %p225 = scmp.ne.s32.totalorder %s214, %s217
      %p226 = scmp.eq.s32.totalorder %s28, 1
      %p227 = por %p225, %p226
      %p228 = scmp.ne.s32.totalorder %s217, %s218
      %p229 = scmp.eq.s32.totalorder %s28, 0
      %p230 = por %p228, %p229
      %p231 = scmp.ne.s32.totalorder %s217, %s218
      %p232 = scmp.eq.s32.totalorder %s29, 1
      %p233 = por %p231, %p232
      %p235 = scmp.ne.s32.totalorder %s218, %s234
      %p236 = scmp.eq.s32.totalorder %s29, 0
      %p237 = por %p235, %p236
      %s238 = ssub.s32 %s30, %s49
      %p239 = scmp.eq.s32.totalorder %s238, 0
      %s241 = sadd.s32 %s240, 1
      %s242 = scalar_select %p239, %s240, %s241
      %p245 = pneg %p239
      %p246 = scmp.eq.s32.totalorder %s23, 1
      %p247 = por %p245, %p246
      %p248 = scmp.ne.s32.totalorder %s240, %s243
      %p249 = scmp.eq.s32.totalorder %s23, 0
      %p250 = por %p248, %p249
      %p251 = scmp.ne.s32.totalorder %s240, %s243
      %p252 = scmp.eq.s32.totalorder %s28, 1
      %p253 = por %p251, %p252
      %p254 = scmp.ne.s32.totalorder %s243, %s244
      %p255 = scmp.eq.s32.totalorder %s28, 0
      %p256 = por %p254, %p255
      %p257 = scmp.ne.s32.totalorder %s243, %s244
      %p258 = scmp.eq.s32.totalorder %s29, 1
      %p259 = por %p257, %p258
      %p261 = scmp.ne.s32.totalorder %s244, %s260
      %p262 = scmp.eq.s32.totalorder %s29, 0
      %p263 = por %p261, %p262
      %s264 = ssub.s32 %s30, %s49
      %p265 = scmp.eq.s32.totalorder %s264, 0
      %s267 = sadd.s32 %s266, 1
      %s268 = scalar_select %p265, %s266, %s267
      %p271 = pneg %p265
      %p272 = scmp.eq.s32.totalorder %s23, 1
      %p273 = por %p271, %p272
      %p274 = scmp.ne.s32.totalorder %s266, %s269
      %p275 = scmp.eq.s32.totalorder %s23, 0
      %p276 = por %p274, %p275
      %p277 = scmp.ne.s32.totalorder %s266, %s269
      %p278 = scmp.eq.s32.totalorder %s28, 1
      %p279 = por %p277, %p278
      %p280 = scmp.ne.s32.totalorder %s269, %s270
      %p281 = scmp.eq.s32.totalorder %s28, 0
      %p282 = por %p280, %p281
      %p283 = scmp.ne.s32.totalorder %s269, %s270
      %p284 = scmp.eq.s32.totalorder %s29, 1
      %p285 = por %p283, %p284
      %p287 = scmp.ne.s32.totalorder %s270, %s286
      %p288 = scmp.eq.s32.totalorder %s29, 0
      %p289 = por %p287, %p288
      %s290 = ssub.s32 %s30, %s49
      %p291 = scmp.eq.s32.totalorder %s290, 0
      %s293 = sadd.s32 %s292, 1
      %s294 = scalar_select %p291, %s292, %s293
      %p297 = pneg %p291
      %p298 = scmp.eq.s32.totalorder %s23, 1
      %p299 = por %p297, %p298
      %p300 = scmp.ne.s32.totalorder %s292, %s295
      %p301 = scmp.eq.s32.totalorder %s23, 0
      %p302 = por %p300, %p301
      %p303 = scmp.ne.s32.totalorder %s292, %s295
      %p304 = scmp.eq.s32.totalorder %s28, 1
      %p305 = por %p303, %p304
      %p306 = scmp.ne.s32.totalorder %s295, %s296
      %p307 = scmp.eq.s32.totalorder %s28, 0
      %p308 = por %p306, %p307
      %p309 = scmp.ne.s32.totalorder %s295, %s296
      %p310 = scmp.eq.s32.totalorder %s29, 1
      %p311 = por %p309, %p310
      %p313 = scmp.ne.s32.totalorder %s296, %s312
      %p314 = scmp.eq.s32.totalorder %s29, 0
      %p315 = por %p313, %p314
      %s316 = ssub.s32 %s30, %s49
      %p317 = scmp.eq.s32.totalorder %s316, 0
      %s319 = sadd.s32 %s318, 1
      %s320 = scalar_select %p317, %s318, %s319
      %p323 = pneg %p317
      %p324 = scmp.eq.s32.totalorder %s23, 1
      %p325 = por %p323, %p324
      %p326 = scmp.ne.s32.totalorder %s318, %s321
      %p327 = scmp.eq.s32.totalorder %s23, 0
      %p328 = por %p326, %p327
      %p329 = scmp.ne.s32.totalorder %s318, %s321
      %p330 = scmp.eq.s32.totalorder %s28, 1
      %p331 = por %p329, %p330
      %p332 = scmp.ne.s32.totalorder %s321, %s322
      %p333 = scmp.eq.s32.totalorder %s28, 0
      %p334 = por %p332, %p333
      %p335 = scmp.ne.s32.totalorder %s321, %s322
      %p336 = scmp.eq.s32.totalorder %s29, 1
      %p337 = por %p335, %p336
      %p339 = scmp.ne.s32.totalorder %s322, %s338
      %p340 = scmp.eq.s32.totalorder %s29, 0
      %p341 = por %p339, %p340
      %p342 = scmp.le.s32.totalorder 1, %s23
      %p343 = scmp.lt.s32.totalorder %s23, 3
      %p344 = pnand %p342, %p343
      %p345 = pneg %p344
      // Predicated region
      $region9: #{tpu_custom_call.1} parent=5 // pred_check
        _
      $region10: #{tpu_custom_call.1} parent=5 // pred_check_branch
        %347 = sbr.rel (%p344) target = $region12
      $region11: #{tpu_custom_call.1} parent=5 // pred_region
        %s348 = ssub.s32 %s23, 1
        // Predicated region
        $region13: #{tpu_custom_call.1} parent=11 // pred_check
          %p349 = pneg %p119
        $region14: #{tpu_custom_call.1} parent=11 // pred_check_branch
          %351 = sbr.rel (%p349) target = $region16
        $region15: #{tpu_custom_call.1} parent=11 // pred_region
          _
        $region16: #{tpu_custom_call.1} parent=11 // pred_fallthru
          _
        // Predicated region
        $region17: #{tpu_custom_call.1} parent=11 // pred_check
          %p352 = pneg %p200
        $region18: #{tpu_custom_call.1} parent=11 // pred_check_branch
          %354 = sbr.rel (%p352) target = $region20
        $region19: #{tpu_custom_call.1} parent=11 // pred_region
          _
        $region20: #{tpu_custom_call.1} parent=11 // pred_fallthru
          _
      $region12: #{tpu_custom_call.1} parent=5 // pred_fallthru
        _
      %p355 = scmp.lt.s32.totalorder %s23, 2
      // Predicated region
      $region21: #{tpu_custom_call.1} parent=5 // pred_check
        %p356 = pneg %p355
      $region22: #{tpu_custom_call.1} parent=5 // pred_check_branch
        %358 = sbr.rel (%p356) target = $region24
      $region23: #{tpu_custom_call.1} parent=5 // pred_region
        // Predicated region
        $region25: #{tpu_custom_call.1} parent=23 // pred_check
          %p359 = pneg %p64
        $region26: #{tpu_custom_call.1} parent=23 // pred_check_branch
          %361 = sbr.rel (%p359) target = $region28
        $region27: #{tpu_custom_call.1} parent=23 // pred_region
          %p362 = scmp.lt.s32.totalorder %s31, 1
          %s363 = scalar_select %p362, %s31, 1
          %p364 = scmp.lt.s32.totalorder %s30, 0
          %s365 = scalar_select %p364, %s30, 0
          %s366 = sadd.s32 %s365, %s363
          %s367 = smul.addr %s366, 2
          %s368 = scalar_lea.vmem %s0, %s367
        $region28: #{tpu_custom_call.1} parent=23 // pred_fallthru
          _
        // Predicated region
        $region29: #{tpu_custom_call.1} parent=23 // pred_check
          %p369 = pneg %p92
        $region30: #{tpu_custom_call.1} parent=23 // pred_check_branch
          %371 = sbr.rel (%p369) target = $region32
        $region31: #{tpu_custom_call.1} parent=23 // pred_region
          %p372 = scmp.lt.s32.totalorder %s31, 1
          %s373 = scalar_select %p372, %s31, 1
          %p374 = scmp.lt.s32.totalorder %s30, 0
          %s375 = scalar_select %p374, %s30, 0
          %s376 = sadd.s32 %s375, %s373
          %s377 = smul.addr %s376, 2
          %s378 = scalar_lea.vmem %s1, %s377
        $region32: #{tpu_custom_call.1} parent=23 // pred_fallthru
          _
        // Predicated region
        $region33: #{tpu_custom_call.1} parent=23 // pred_check
          %p379 = pneg %p143
        $region34: #{tpu_custom_call.1} parent=23 // pred_check_branch
          %381 = sbr.rel (%p379) target = $region36
        $region35: #{tpu_custom_call.1} parent=23 // pred_region
          %s382 = smul.u32 2, %s30
          %p383 = scmp.lt.s32.totalorder %s31, 1
          %s384 = scalar_select %p383, %s31, 1
          %p385 = scmp.lt.s32.totalorder %s382, 1
          %s386 = scalar_select %p385, %s382, 1
          %p387 = scmp.lt.s32.totalorder %s32, 0
          %s388 = scalar_select %p387, %s32, 0
          %s389 = sadd.s32 %s388, %s386
          %s390 = smul.addr %s384, 2
          %s391 = sadd.s32 %s389, %s390
          %s392 = smul.addr %s391, 8
          %s393 = scalar_lea.vmem %s3, %s392
          %s394 = smul.u32 2, %s30
        $region36: #{tpu_custom_call.1} parent=23 // pred_fallthru
          _
        // Predicated region
        $region37: #{tpu_custom_call.1} parent=23 // pred_check
          %p395 = pneg %p173
        $region38: #{tpu_custom_call.1} parent=23 // pred_check_branch
          %397 = sbr.rel (%p395) target = $region40
        $region39: #{tpu_custom_call.1} parent=23 // pred_region
          %s398 = sand.u32 %s163, 1
          %s399 = scalar_lea.sflag [#allocation7], %s398
          %s400 = sand.u32 %s163, 1
          %s401 = smul.addr %s400, 16
          %s402 = scalar_lea.vmem [#allocation6], %s401
          %s403 = smul.u32 2, %s30
          %s405 = ssub.s32 256, 256
          %406 = vsyncadd %s399, %s405
          %s407 = sadd.s32 %s32, %s403
          %s408 = smul.addr %s31, 2
          %s409 = sadd.s32 %s407, %s408
          %s410 = smul.addr %s409, 128
          %s411 = scalar_lea.hbm %s4, %s410
          %s412 = sshll.u32 %s402, 4
          %s413 = int_to_ptr.vmem [resolvable:$true] %s412
          %418 = dma.hbm_to_vmem [thread:$0]  %s411, 256, %s413, %s399, 128, 128, 8
        $region40: #{tpu_custom_call.1} parent=23 // pred_fallthru
          _
        // Predicated region
        $region41: #{tpu_custom_call.1} parent=23 // pred_check
          %p419 = pneg %p224
        $region42: #{tpu_custom_call.1} parent=23 // pred_check_branch
          %421 = sbr.rel (%p419) target = $region44
        $region43: #{tpu_custom_call.1} parent=23 // pred_region
          %s422 = smul.u32 2, %s30
          %p423 = scmp.lt.s32.totalorder %s31, 1
          %s424 = scalar_select %p423, %s31, 1
          %p425 = scmp.lt.s32.totalorder %s422, 1
          %s426 = scalar_select %p425, %s422, 1
          %p427 = scmp.lt.s32.totalorder %s32, 0
          %s428 = scalar_select %p427, %s32, 0
          %s429 = sadd.s32 %s428, %s426
          %s430 = smul.addr %s424, 2
          %s431 = sadd.s32 %s429, %s430
          %s432 = smul.addr %s431, 8
          %s433 = scalar_lea.vmem %s6, %s432
          %s434 = smul.u32 2, %s30
        $region44: #{tpu_custom_call.1} parent=23 // pred_fallthru
          _
      $region24: #{tpu_custom_call.1} parent=5 // pred_fallthru
        _
      %p435 = scmp.le.s32.totalorder 1, %s23
      %p436 = scmp.lt.s32.totalorder %s23, 3
      %p437 = pnand %p435, %p436
      %p438 = pneg %p437
      // Predicated region
      $region45: #{tpu_custom_call.1} parent=5 // pred_check
        _
      $region46: #{tpu_custom_call.1} parent=5 // pred_check_branch
        %440 = sbr.rel (%p437) target = $region48
      $region47: #{tpu_custom_call.1} parent=5 // pred_region
        %s441 = ssub.s32 %s23, 1
        %s442 = sand.u32 %s166, 1
        %s443 = scalar_lea.sflag [#allocation7], %s442
        %s444 = sand.u32 %s166, 1
        %s445 = smul.addr %s444, 16
        %s446 = scalar_lea.vmem [#allocation6], %s445
        // Predicated region
        $region49: #{tpu_custom_call.1} parent=47 // pred_check
          %p447 = pneg %p179
        $region50: #{tpu_custom_call.1} parent=47 // pred_check_branch
          %449 = sbr.rel (%p447) target = $region52
        $region51: #{tpu_custom_call.1} parent=47 // pred_region
          %450 = dma.done %s443, 256
        $region52: #{tpu_custom_call.1} parent=47 // pred_fallthru
          _
        %p451 = scmp.lt.s32.totalorder %s34, 1
        %s452 = scalar_select %p451, %s34, 1
        %p453 = scmp.lt.s32.totalorder %s33, 0
        %s454 = scalar_select %p453, %s33, 0
        %s455 = sadd.s32 %s454, %s452
        %s456 = smul.addr %s455, 2
        %s457 = scalar_lea.vmem %s0, %s456
        %p458 = pneg %p70
        %p459 = pneg %p67
        %p460 = scmp.lt.s32.totalorder %s34, 1
        %s461 = scalar_select %p460, %s34, 1
        %p462 = scmp.lt.s32.totalorder %s33, 0
        %s463 = scalar_select %p462, %s33, 0
        %s464 = sadd.s32 %s463, %s461
        %s465 = smul.addr %s464, 2
        %s466 = scalar_lea.vmem %s1, %s465
        %p467 = pneg %p98
        %p468 = pneg %p95
        %p469 = pneg %p119
        %p470 = pneg %p116
        %s471 = smul.u32 2, %s33
        %p472 = scmp.lt.s32.totalorder %s34, 1
        %s473 = scalar_select %p472, %s34, 1
        %p474 = scmp.lt.s32.totalorder %s471, 1
        %s475 = scalar_select %p474, %s471, 1
        %p476 = scmp.lt.s32.totalorder %s35, 0
        %s477 = scalar_select %p476, %s35, 0
        %s478 = sadd.s32 %s477, %s475
        %s479 = smul.addr %s473, 2
        %s480 = sadd.s32 %s478, %s479
        %s481 = smul.addr %s480, 8
        %s482 = scalar_lea.vmem %s3, %s481
        %p483 = pneg %p149
        %p484 = pneg %p146
        %s485 = sand.u32 %s166, 1
        %s486 = scalar_lea.sflag [#allocation7], %s485
        %s487 = sand.u32 %s166, 1
        %s488 = smul.addr %s487, 16
        %s489 = scalar_lea.vmem [#allocation6], %s488
        %p490 = pneg %p179
        %p491 = pneg %p176
        %p492 = pneg %p200
        %p493 = pneg %p197
        %s494 = smul.u32 2, %s33
        %p495 = scmp.lt.s32.totalorder %s34, 1
        %s496 = scalar_select %p495, %s34, 1
        %p497 = scmp.lt.s32.totalorder %s494, 1
        %s498 = scalar_select %p497, %s494, 1
        %p499 = scmp.lt.s32.totalorder %s35, 0
        %s500 = scalar_select %p499, %s35, 0
        %s501 = sadd.s32 %s500, %s498
        %s502 = smul.addr %s496, 2
        %s503 = sadd.s32 %s501, %s502
        %s504 = smul.addr %s503, 8
        %s505 = scalar_lea.vmem %s6, %s504
        %p506 = pneg %p230
        %p507 = pneg %p227
        %p508 = pneg %p256
        %p509 = pneg %p253
        %p510 = pneg %p282
        %p511 = pneg %p279
        %p512 = pneg %p308
        %p513 = pneg %p305
        %p514 = pneg %p334
        %p515 = pneg %p331
        %p516 = scmp.lt.s32.totalorder %s34, 1
        %s517 = scalar_select %p516, %s34, 1
        %p518 = scmp.lt.s32.totalorder %s33, 0
        %s519 = scalar_select %p518, %s33, 0
        %s520 = sadd.s32 %s519, %s517
        %s521 = smul.addr %s520, 2
        %s522 = scalar_lea.vmem %s0, %s521
        %p523 = scmp.lt.s32.totalorder %s34, 1
        %s524 = scalar_select %p523, %s34, 1
        %p525 = scmp.lt.s32.totalorder %s33, 0
        %s526 = scalar_select %p525, %s33, 0
        %s527 = sadd.s32 %s526, %s524
        %s528 = smul.addr %s527, 2
        %s529 = scalar_lea.vmem %s1, %s528
        %s530 = smul.u32 2, %s33
        %p531 = scmp.lt.s32.totalorder %s34, 1
        %s532 = scalar_select %p531, %s34, 1
        %p533 = scmp.lt.s32.totalorder %s530, 1
        %s534 = scalar_select %p533, %s530, 1
        %p535 = scmp.lt.s32.totalorder %s35, 0
        %s536 = scalar_select %p535, %s35, 0
        %s537 = sadd.s32 %s536, %s534
        %s538 = smul.addr %s532, 2
        %s539 = sadd.s32 %s537, %s538
        %s540 = smul.addr %s539, 8
        %s541 = scalar_lea.vmem %s3, %s540
        %s542 = smul.u32 2, %s33
        %s543 = smul.u32 2, %s33
        %s544 = smul.u32 2, %s33
        %p545 = scmp.lt.s32.totalorder %s34, 1
        %s546 = scalar_select %p545, %s34, 1
        %p547 = scmp.lt.s32.totalorder %s544, 1
        %s548 = scalar_select %p547, %s544, 1
        %p549 = scmp.lt.s32.totalorder %s35, 0
        %s550 = scalar_select %p549, %s35, 0
        %s551 = sadd.s32 %s550, %s548
        %s552 = smul.addr %s546, 2
        %s553 = sadd.s32 %s551, %s552
        %s554 = smul.addr %s553, 8
        %s555 = scalar_lea.vmem %s6, %s554
        %s556 = smul.u32 2, %s33
        %p557 = scmp.eq.s32.totalorder %s34, 0
        %p558 = scmp.eq.s32.totalorder %s35, 0
        %p559 = pnand %p557, %p558
        %p560 = pneg %p559
        // Predicated region
        $region53: #{tpu_custom_call.1} parent=47 // pred_check
          _
        $region54: #{tpu_custom_call.1} parent=47 // pred_check_branch
          %562 = sbr.rel (%p559) target = $region56
        $region55: #{tpu_custom_call.1} parent=47 // pred_region
          %vm563 = vcmask 0
          %564 = vst.msk [vmem:[#allocation9] sm:$0x1] %vm563, 0.0
          %565 = vst.msk [vmem:[#allocation10] sm:$0x1] %vm563, 0.0
          %vm566 = vcmask 253952
          %567 = vst.msk [vmem:[#allocation12] sm:$0x1] %vm566, 0.0
          %568 = vst.msk [vmem:[#allocation13] sm:$0x1] %vm566, 0.0
          %vm569 = vcmask 254976
          %570 = vst.msk [vmem:[#allocation2] sm:$0x3] %vm569, 0.0
          %571 = vst.msk [vmem:[#allocation3] sm:$0x3] %vm569, 0.0
        $region56: #{tpu_custom_call.1} parent=47 // pred_fallthru
          _
        // Predicated region
        $region57: #{tpu_custom_call.1} parent=47 // pred_check
          %p572 = pneg %p558
        $region58: #{tpu_custom_call.1} parent=47 // pred_check_branch
          %574 = sbr.rel (%p572) target = $region60
        $region59: #{tpu_custom_call.1} parent=47 // pred_region
          %vm575 = vcmask 1024
          %576 = vst.msk [vmem:[#allocation4] sm:$0x3] %vm575, 0.0
          %577 = vst.msk [vmem:[#allocation5] sm:$0x3] %vm575, 0.0
          %v578 = vld [vmem:[%s522] sm:$0x3]
          %v579 = vld [vmem:[%s529] sm:$0x3]
          %v580 = vld [vmem:[%s2] sm:$0x1]
          %v582 = vlaneseq
          %v583 = vshrl.u32 %v582, 7
          %v584 = vsub.s32 0, %v583
          %v585 = vrot.slane %v580, %v584
          %v587 = vsub.f32 %v578, %v585
          %v588 = vmul.f32 %v587, 16.0
          %vm589 = vcmask 254976
          %v590 = vsel %vm589, %v588, -inf
          %591 = vmax.xlane.f32.xlu0 %v590
          %v592 = vpop.xlane.xlu0 %591
          %v593 = vsub.f32 %v588, %v592
          %v594 = vmul.f32 %v593, 1.442695
          %v595 = vpow.pop %v594
          %v596 = vsel %vm589, %v595, 0.0
          %597 = vadd.xlane.f32.xlu0 %v596
          %v598 = vpop.xlane.xlu0 %597
          %v599 = vrcp.pop %v598
          %v600 = vmul.f32 %v598, %v599
          %v601 = vsub.f32 2.0, %v600
          %v602 = vmul.f32 %v599, %v601
          %v603 = vmul.f32 %v595, %v602
          %v604 = vmul.f32 %v579, 10.0
          %v605 = vsel %vm589, %v604, -inf
          %606 = vmax.xlane.f32.xlu0 %v605
          %v607 = vpop.xlane.xlu0 %606
          %v608 = vsub.f32 %v604, %v607
          %v609 = vmul.f32 %v608, 1.442695
          %v610 = vpow.pop %v609
          %v611 = vsel %vm589, %v610, 0.0
          %612 = vadd.xlane.f32.xlu0 %v611
          %v613 = vpop.xlane.xlu0 %612
          %v614 = vlog2.pop %v613
          %v615 = vmul.f32 %v614, 0.6931472
          %v616 = vsub.f32 %v608, %v615
          %v617 = vld [vmem:[#allocation9] sm:$0x1]
          %v618 = vmul.f32 %v603, %v616
          %v619 = vsel %vm589, %v618, 0.0
          %620 = vadd.xlane.f32.xlu0 %v619
          %v621 = vpop.xlane.xlu0 %620
          %v622 = vrot.slane %v621, 4
          %v623 = vadd.f32 %v621, %v622
          %v624 = vrot.slane %v623, 2
          %v625 = vadd.f32 %v623, %v624
          %v626 = vrot.slane %v625, 1
          %v627 = vadd.f32 %v625, %v626
          %s628 = vtos %v627
          %v629 = vstv %s628
          %v630 = vadd.f32 %v617, %v629
          %vm631 = vcmask 0
          %632 = vst.msk [vmem:[#allocation9] sm:$0x1] %vm631, %v630
          %v633 = vld [vmem:[#allocation2] sm:$0x3]
          %v634 = vadd.f32 %v633, %v603
          %635 = vst.msk [vmem:[#allocation2] sm:$0x3] %vm589, %v634
          %v636 = vld [vmem:[#allocation3] sm:$0x3]
          %v637 = vadd.f32 %v636, %v616
          %638 = vst.msk [vmem:[#allocation3] sm:$0x3] %vm589, %v637
          %v639 = vld [vmem:[#allocation12] sm:$0x1]
          %v640 = vsel %vm589, %v578, 0.0
          %v641 = vrot.slane %v640, 4
          %v642 = vadd.f32 %v640, %v641
          %v643 = vrot.slane %v642, 2
          %v644 = vadd.f32 %v642, %v643
          %v645 = vrot.slane %v644, 1
          %v646 = vadd.f32 %v644, %v645
          %v647 = vadd.f32 %v639, %v646
          %vm648 = vcmask 253952
          %649 = vst.msk [vmem:[#allocation12] sm:$0x1] %vm648, %v647
        $region60: #{tpu_custom_call.1} parent=47 // pred_fallthru
          _
        %p650 = scmp.eq.s32.totalorder %s34, 1
        %p651 = pnand %p558, %p650
        %p652 = pneg %p651
        // Predicated region
        $region61: #{tpu_custom_call.1} parent=47 // pred_check
          _
        $region62: #{tpu_custom_call.1} parent=47 // pred_check_branch
          %654 = sbr.rel (%p651) target = $region64
        $region63: #{tpu_custom_call.1} parent=47 // pred_region
          %v655 = vld [vmem:[#allocation9] sm:$0x1]
          %v656 = vld [vmem:[#allocation2] sm:$0x3]
          %v657 = vld [vmem:[#allocation3] sm:$0x3]
          %v658 = vmul.f32 %v656, %v657
          %vm659 = vcmask 254976
          %v660 = vsel %vm659, %v658, 0.0
          %661 = vadd.xlane.f32.xlu0 %v660
          %v662 = vpop.xlane.xlu0 %661
          %v663 = vrot.slane %v662, 4
          %v664 = vadd.f32 %v662, %v663
          %v665 = vrot.slane %v664, 2
          %v666 = vadd.f32 %v664, %v665
          %v667 = vrot.slane %v666, 1
          %v668 = vadd.f32 %v666, %v667
          %s669 = vtos %v668
          %v670 = vstv %s669
          %v671 = vsub.f32 %v655, %v670
          %vm672 = vcmask 0
          %673 = vst.msk [vmem:[#allocation9] sm:$0x1] %vm672, %v671
        $region64: #{tpu_custom_call.1} parent=47 // pred_fallthru
          _
        %v674 = vld [vmem:[%s541] sm:$0xff]
        %v675 = vld [vmem:[%s541 + $0x8] sm:$0xff]
        %v676 = vld [vmem:[%s446] sm:$0xff]
        %v677 = vld [vmem:[%s446 + $0x8] sm:$0xff]
        %v678 = vld [vmem:[%s5] sm:$0x1]
        %v679 = vld [vmem:[%s555] sm:$0xff]
        %v680 = vld [vmem:[%s555 + $0x8] sm:$0xff]
        %v681 = vsub.f32 1.0, %v679
        %v682 = vsub.f32 1.0, %v680
        %v684 = vlaneseq
        %v685 = vshrl.u32 %v684, 7
        %v686 = vsub.s32 0, %v685
        %v687 = vrot.slane %v678, %v686
        %v689 = vsub.f32 %v674, %v687
        %v690 = vsub.f32 %v675, %v687
        %v691 = vmul.f32 %v689, 16.0
        %v692 = vmul.f32 %v690, 16.0
        %vm693 = vcmask 261120
        %v694 = vsel %vm693, %v691, -inf
        %695 = vmax.xlane.f32.xlu0 %v694
        %v696 = vpop.xlane.xlu0 %695
        %v697 = vsel %vm693, %v692, -inf
        %698 = vmax.xlane.f32.xlu0 %v697
        %v699 = vpop.xlane.xlu0 %698
        %v700 = vsub.f32 %v691, %v696
        %v701 = vsub.f32 %v692, %v699
        %v702 = vmul.f32 %v700, 1.442695
        %v703 = vpow.pop %v702
        %v704 = vmul.f32 %v701, 1.442695
        %v705 = vpow.pop %v704
        %v706 = vsel %vm693, %v703, 0.0
        %707 = vadd.xlane.f32.xlu0 %v706
        %v708 = vpop.xlane.xlu0 %707
        %v709 = vsel %vm693, %v705, 0.0
        %710 = vadd.xlane.f32.xlu0 %v709
        %v711 = vpop.xlane.xlu0 %710
        %v712 = vmul.f32 %v676, 10.0
        %v713 = vmul.f32 %v677, 10.0
        %v714 = vsel %vm693, %v712, -inf
        %715 = vmax.xlane.f32.xlu0 %v714
        %v716 = vpop.xlane.xlu0 %715
        %v717 = vsel %vm693, %v713, -inf
        %718 = vmax.xlane.f32.xlu0 %v717
        %v719 = vpop.xlane.xlu0 %718
        %v720 = vsub.f32 %v712, %v716
        %v721 = vsub.f32 %v713, %v719
        %v722 = vmul.f32 %v720, 1.442695
        %v723 = vpow.pop %v722
        %v724 = vmul.f32 %v721, 1.442695
        %v725 = vpow.pop %v724
        %v726 = vsel %vm693, %v723, 0.0
        %727 = vadd.xlane.f32.xlu0 %v726
        %v728 = vpop.xlane.xlu0 %727
        %v729 = vsel %vm693, %v725, 0.0
        %730 = vadd.xlane.f32.xlu0 %v729
        %v731 = vpop.xlane.xlu0 %730
        %v732 = vlog2.pop %v728
        %v733 = vmul.f32 %v732, 0.6931472
        %v734 = vlog2.pop %v731
        %v735 = vmul.f32 %v734, 0.6931472
        %v736 = vmul.f32 %v703, %v720
        %v737 = vmul.f32 %v705, %v721
        %v738 = vsel %vm693, %v736, 0.0
        %739 = vadd.xlane.f32.xlu0 %v738
        %v740 = vpop.xlane.xlu0 %739
        %v741 = vsel %vm693, %v737, 0.0
        %742 = vadd.xlane.f32.xlu0 %v741
        %v743 = vpop.xlane.xlu0 %742
        %v744 = vrcp.pop %v708
        %v745 = vrcp.pop %v711
        %v746 = vmul.f32 %v708, %v744
        %v747 = vmul.f32 %v711, %v745
        %v748 = vsub.f32 2.0, %v746
        %v749 = vsub.f32 2.0, %v747
        %v750 = vmul.f32 %v744, %v748
        %v751 = vmul.f32 %v745, %v749
        %v752 = vmul.f32 %v740, %v750
        %v753 = vmul.f32 %v743, %v751
        %v754 = vsub.f32 %v733, %v752
        %v755 = vsub.f32 %v735, %v753
        %v756 = vld [vmem:[#allocation4] sm:$0x3]
        %v757 = vmul.f32 %v754, %v681
        %v758 = vmul.f32 %v755, %v682
        %vm759 = vcmask 7168
        %v760 = vsel %vm759, %v757, 0.0
        %v761 = vrot.slane %v760, 4
        %v762 = vadd.f32 %v760, %v761
        %v763 = vrot.slane %v762, 2
        %v764 = vadd.f32 %v762, %v763
        %v765 = vrot.slane %v764, 1
        %v766 = vadd.f32 %v764, %v765
        %v767 = vsel %vm759, %v758, 0.0
        %v768 = vrot.slane %v767, 4
        %v769 = vadd.f32 %v767, %v768
        %v770 = vrot.slane %v769, 2
        %v771 = vadd.f32 %v769, %v770
        %v772 = vrot.slane %v771, 1
        %v773 = vadd.f32 %v771, %v772
        %vm776 = vcmask 1041409
        %v777 = vsel %vm776, %v773, %v766
        %v779 = vadd.f32 %v756, %v777
        %vm780 = vcmask 1024
        %781 = vst.msk [vmem:[#allocation4] sm:$0x3] %vm780, %v779
        %v782 = vld [vmem:[#allocation5] sm:$0x3]
        %v783 = vsel %vm759, %v681, 0.0
        %v784 = vrot.slane %v783, 4
        %v785 = vadd.f32 %v783, %v784
        %v786 = vrot.slane %v785, 2
        %v787 = vadd.f32 %v785, %v786
        %v788 = vrot.slane %v787, 1
        %v789 = vadd.f32 %v787, %v788
        %v790 = vsel %vm759, %v682, 0.0
        %v791 = vrot.slane %v790, 4
        %v792 = vadd.f32 %v790, %v791
        %v793 = vrot.slane %v792, 2
        %v794 = vadd.f32 %v792, %v793
        %v795 = vrot.slane %v794, 1
        %v796 = vadd.f32 %v794, %v795
        %v799 = vsel %vm776, %v796, %v789
        %v801 = vadd.f32 %v782, %v799
        %802 = vst.msk [vmem:[#allocation5] sm:$0x3] %vm780, %v801
        %v803 = vld [vmem:[#allocation13] sm:$0x1]
        %v804 = vsel %vm693, %v674, 0.0
        %v805 = vsel %vm693, %v675, 0.0
        %v806 = vadd.f32 %v804, %v805
        %v807 = vrot.slane %v806, 4
        %v808 = vadd.f32 %v806, %v807
        %v809 = vrot.slane %v808, 2
        %v810 = vadd.f32 %v808, %v809
        %v811 = vrot.slane %v810, 1
        %v812 = vadd.f32 %v810, %v811
        %v813 = vadd.f32 %v803, %v812
        %vm814 = vcmask 253952
        %815 = vst.msk [vmem:[#allocation13] sm:$0x1] %vm814, %v813
        // Predicated region
        $region65: #{tpu_custom_call.1} parent=47 // pred_check
          %p816 = pneg %p558
        $region66: #{tpu_custom_call.1} parent=47 // pred_check_branch
          %818 = sbr.rel (%p816) target = $region68
        $region67: #{tpu_custom_call.1} parent=47 // pred_region
          %v819 = vld [vmem:[#allocation4] sm:$0x3]
          %v820 = vld [vmem:[#allocation5] sm:$0x3]
          %v821 = vmax.f32 %v820, 1.0
          %v822 = vrcp.pop %v821
          %v823 = vmul.f32 %v821, %v822
          %v824 = vsub.f32 2.0, %v823
          %v825 = vmul.f32 %v822, %v824
          %v826 = vmul.f32 %v819, %v825
          %v827 = vld [vmem:[#allocation10] sm:$0x1]
          %v828 = vsel %vm780, %v826, 0.0
          %829 = vadd.xlane.f32.xlu0 %v828
          %v830 = vpop.xlane.xlu0 %829
          %v831 = vrot.slane %v830, 4
          %v832 = vadd.f32 %v830, %v831
          %v833 = vrot.slane %v832, 2
          %v834 = vadd.f32 %v832, %v833
          %v835 = vrot.slane %v834, 1
          %v836 = vadd.f32 %v834, %v835
          %s837 = vtos %v836
          %v838 = vstv %s837
          %v839 = vadd.f32 %v827, %v838
          %vm840 = vcmask 0
          %841 = vst.msk [vmem:[#allocation10] sm:$0x1] %vm840, %v839
        $region68: #{tpu_custom_call.1} parent=47 // pred_fallthru
          _
        // Predicated region
        $region69: #{tpu_custom_call.1} parent=47 // pred_check
          %p842 = pneg %p253
        $region70: #{tpu_custom_call.1} parent=47 // pred_check_branch
          %844 = sbr.rel (%p842) target = $region72
        $region71: #{tpu_custom_call.1} parent=47 // pred_region
          %s846 = ssub.s32 16, 16
          %847 = vsyncadd [#allocation8], %s846
          %s848 = smul.addr %s33, 16
          %s849 = scalar_lea.hbm %s7, %s848
          %s851 = sshll.u32 [#allocation9], 4
          %s852 = int_to_ptr.vmem [resolvable:$true] %s851
          %854 = dma.vmem_to_hbm [thread:$0]  %s852, 16, %s849, [#allocation8]
        $region72: #{tpu_custom_call.1} parent=47 // pred_fallthru
          _
        // Predicated region
        $region73: #{tpu_custom_call.1} parent=47 // pred_check
          %p855 = pneg %p279
        $region74: #{tpu_custom_call.1} parent=47 // pred_check_branch
          %857 = sbr.rel (%p855) target = $region76
        $region75: #{tpu_custom_call.1} parent=47 // pred_region
          %s859 = ssub.s32 16, 16
          %860 = vsyncadd [#allocation11], %s859
          %s861 = smul.addr %s33, 16
          %s862 = scalar_lea.hbm %s8, %s861
          %s864 = sshll.u32 [#allocation10], 4
          %s865 = int_to_ptr.vmem [resolvable:$true] %s864
          %867 = dma.vmem_to_hbm [thread:$0]  %s865, 16, %s862, [#allocation11]
        $region76: #{tpu_custom_call.1} parent=47 // pred_fallthru
          _
        // Predicated region
        $region77: #{tpu_custom_call.1} parent=47 // pred_check
          %p868 = pneg %p305
        $region78: #{tpu_custom_call.1} parent=47 // pred_check_branch
          %870 = sbr.rel (%p868) target = $region80
        $region79: #{tpu_custom_call.1} parent=47 // pred_region
          %s872 = ssub.s32 16, 16
          %873 = vsyncadd [#allocation11], %s872
          %s874 = smul.addr %s33, 16
          %s875 = scalar_lea.hbm %s9, %s874
          %s877 = sshll.u32 [#allocation12], 4
          %s878 = int_to_ptr.vmem [resolvable:$true] %s877
          %880 = dma.vmem_to_hbm [thread:$0]  %s878, 16, %s875, [#allocation11]
        $region80: #{tpu_custom_call.1} parent=47 // pred_fallthru
          _
        // Predicated region
        $region81: #{tpu_custom_call.1} parent=47 // pred_check
          %p881 = pneg %p331
        $region82: #{tpu_custom_call.1} parent=47 // pred_check_branch
          %883 = sbr.rel (%p881) target = $region84
        $region83: #{tpu_custom_call.1} parent=47 // pred_region
          %s885 = ssub.s32 16, 16
          %886 = vsyncadd [#allocation14], %s885
          %s887 = smul.addr %s33, 16
          %s888 = scalar_lea.hbm %s10, %s887
          %s890 = sshll.u32 [#allocation13], 4
          %s891 = int_to_ptr.vmem [resolvable:$true] %s890
          %893 = dma.vmem_to_hbm [thread:$0]  %s891, 16, %s888, [#allocation14]
        $region84: #{tpu_custom_call.1} parent=47 // pred_fallthru
          _
        // Predicated region
        $region85: #{tpu_custom_call.1} parent=47 // pred_check
          %p894 = pneg %p253
        $region86: #{tpu_custom_call.1} parent=47 // pred_check_branch
          %896 = sbr.rel (%p894) target = $region88
        $region87: #{tpu_custom_call.1} parent=47 // pred_region
          %897 = dma.done [#allocation8], 16
        $region88: #{tpu_custom_call.1} parent=47 // pred_fallthru
          _
        // Predicated region
        $region89: #{tpu_custom_call.1} parent=47 // pred_check
          %p898 = pneg %p279
        $region90: #{tpu_custom_call.1} parent=47 // pred_check_branch
          %900 = sbr.rel (%p898) target = $region92
        $region91: #{tpu_custom_call.1} parent=47 // pred_region
          %901 = dma.done [#allocation11], 16
        $region92: #{tpu_custom_call.1} parent=47 // pred_fallthru
          _
        // Predicated region
        $region93: #{tpu_custom_call.1} parent=47 // pred_check
          %p902 = pneg %p305
        $region94: #{tpu_custom_call.1} parent=47 // pred_check_branch
          %904 = sbr.rel (%p902) target = $region96
        $region95: #{tpu_custom_call.1} parent=47 // pred_region
          %905 = dma.done [#allocation11], 16
        $region96: #{tpu_custom_call.1} parent=47 // pred_fallthru
          _
        // Predicated region
        $region97: #{tpu_custom_call.1} parent=47 // pred_check
          %p906 = pneg %p331
        $region98: #{tpu_custom_call.1} parent=47 // pred_check_branch
          %908 = sbr.rel (%p906) target = $region100
        $region99: #{tpu_custom_call.1} parent=47 // pred_region
          %909 = dma.done [#allocation14], 16
        $region100: #{tpu_custom_call.1} parent=47 // pred_fallthru
          _
      $region48: #{tpu_custom_call.1} parent=5 // pred_fallthru
        _
      %p910 = scmp.le.s32.totalorder 2, %s23
      // Predicated region
      $region101: #{tpu_custom_call.1} parent=5 // pred_check
        %p911 = pneg %p910
      $region102: #{tpu_custom_call.1} parent=5 // pred_check_branch
        %913 = sbr.rel (%p911) target = $region104
      $region103: #{tpu_custom_call.1} parent=5 // pred_region
        %s914 = ssub.s32 %s23, 2
      $region104: #{tpu_custom_call.1} parent=5 // pred_fallthru
        _
    $region6: #{tpu_custom_call.1} parent=1 // loop_footer
      %s27 = sadd.s32 1, %s23
    $region7: #{tpu_custom_call.1} parent=1 // loop_footer_branch
      %22 = sbr.rel target = $region3
    $region8: #{tpu_custom_call.1} parent=1 // loop_exit
      _
    %915 = vsyncpa [#allocation7], 1
    %s916 = scalar_lea.sflag [#allocation7], 1
    %917 = vsyncpa %s916, 1
    %918 = vsyncpa [#allocation8], 1
    %s919 = scalar_lea.sflag [#allocation8], 1
    %920 = vsyncpa %s919, 1
    %921 = vsyncpa [#allocation11], 1
    %922 = vsyncpa [#allocation14], 1

</llo_original>
